<compile_context>
chip_gen: v6e
topology: v6e:2x2x1
jax: 0.10.0
libtpu: 0.0.40
codegen_flags: <defaults>
</compile_context>

<pallas_src>
import jax
import jax.numpy as jnp
from jax import lax
from jax.experimental import pallas as pl
from jax.experimental.pallas import tpu as pltpu

_LANE = 128
_VMEM_LIMIT = 32 * 1024 * 1024  # bytes; >= every scoped default, < v7x physical


def _pick_tile(total, block, align, min_tiles=2):
    """Pick (tile, num_tiles): tile is a multiple of `align` (or == total).

    Guarantees >= `min_tiles` tiles whenever there is enough work, so the
    "parallel" grid axis can be sharded across both TensorCores on v7x.
    """
    block = max(align, (block // align) * align)
    num = pl.cdiv(total, block)
    if num < min_tiles and total >= 2 * align:
        num = min_tiles
    tile = pl.cdiv(pl.cdiv(total, num), align) * align
    if tile >= total:
        return total, 1          # single full-extent block (always legal)
    return tile, pl.cdiv(total, tile)


# --------------------------------------------------------------------------
# Fast path (D == 2, N % 128 == 0): stream the natural interleaved layout.
# Input view  : (rows, 256)  row r, lane 2j+c == x[128*r + j, c]
# Output      : (rows, 128)  row r, lane j    == y[128*r + j]
# --------------------------------------------------------------------------
def _interleaved_kernel(x_ref, o_ref):
    v = x_ref[...].astype(jnp.float32)          # (tb, 256) interleaved x0/x1
    z = 1.0 - v * v                             # interleaved (1-x0^2)/(1-x1^2)
    # 0/1 selector matrices: sel_even[l, j] = (l == 2j), sel_odd[l, j] = (l == 2j+1).
    r = lax.broadcasted_iota(jnp.int32, (2 * _LANE, _LANE), 0)
    c = lax.broadcasted_iota(jnp.int32, (2 * _LANE, _LANE), 1)
    sel_even = (r == 2 * c).astype(jnp.float32)
    sel_odd = (r == 2 * c + 1).astype(jnp.float32)
    # Lane de-interleave on the (otherwise idle) MXU; exact because the
    # selector entries are exactly 0/1 and accumulation is f32.
    a = jnp.dot(z, sel_even, preferred_element_type=jnp.float32,
                precision=lax.Precision.HIGHEST)        # (tb, 128) = 1 - x0^2
    b = jnp.dot(z, sel_odd, preferred_element_type=jnp.float32,
                precision=lax.Precision.HIGHEST)        # (tb, 128) = 1 - x1^2
    o_ref[...] = (a * b).astype(o_ref.dtype)


def my_feature_interleaved(x, *, block_rows=2048):
    """x: (N, 2), N % 128 == 0, contiguous. Returns (N,). No transpose/pad."""
    n, d = x.shape
    assert d == 2 and n > 0 and n % _LANE == 0
    rows = n // _LANE
    xv = x.reshape(rows, 2 * _LANE)             # free view of the (N, 2) data
    tb, num_tiles = _pick_tile(rows, block_rows, align=32)

    out = pl.pallas_call(
        _interleaved_kernel,
        grid=(num_tiles,),
        in_specs=[pl.BlockSpec((tb, 2 * _LANE), lambda i: (i, 0))],
        out_specs=pl.BlockSpec((tb, _LANE), lambda i: (i, 0)),
        out_shape=jax.ShapeDtypeStruct((rows, _LANE), x.dtype),
        compiler_params=pltpu.CompilerParams(
            dimension_semantics=("parallel",),
            vmem_limit_bytes=_VMEM_LIMIT),
        cost_estimate=pl.CostEstimate(
            flops=int(2 * rows * _LANE * (2 * _LANE) * 2 + 5 * n),
            transcendentals=0,
            bytes_accessed=int(3 * n * x.dtype.itemsize)),
    )(xv)
    return out.reshape(n)


# --------------------------------------------------------------------------
# Fallback path: planar (2, N) input (after one fused slice+transpose pass),
# ragged-N friendly 2-D blocks -> no pad copy and no output slice.
# --------------------------------------------------------------------------
def _planar_kernel(x_ref, o_ref):
    x0 = x_ref[0:1, :].astype(jnp.float32)      # (1, L)
    x1 = x_ref[1:2, :].astype(jnp.float32)      # (1, L)
    o_ref[...] = ((1.0 - x0 * x0) * (1.0 - x1 * x1)).astype(o_ref.dtype)


def my_feature_planar(x01, *, block_lanes=128 * 1024):
    """x01: (2, N) (feature axis leading). Returns (N,). Handles any N."""
    d, n = x01.shape
    assert d == 2 and n > 0
    L, num_tiles = _pick_tile(n, block_lanes, align=_LANE)

    out = pl.pallas_call(
        _planar_kernel,
        grid=(num_tiles,),
        in_specs=[pl.BlockSpec((2, L), lambda i: (0, i))],
        out_specs=pl.BlockSpec((1, L), lambda i: (0, i)),
        out_shape=jax.ShapeDtypeStruct((1, n), x01.dtype),
        compiler_params=pltpu.CompilerParams(
            dimension_semantics=("parallel",),
            vmem_limit_bytes=_VMEM_LIMIT),
        cost_estimate=pl.CostEstimate(
            flops=int(5 * n),
            transcendentals=0,
            bytes_accessed=int(3 * n * x01.dtype.itemsize)),
    )(x01)
    return out.reshape(n)


def my_feature(x, *, interleaved_block_rows=2048, planar_block_lanes=128 * 1024):
    """x: (N, D >= 2). Returns (N,) == (-x[:,0]**2 + 1) * (-x[:,1]**2 + 1)."""
    n, d = x.shape
    assert d >= 2 and n > 0
    if d == 2 and n % _LANE == 0:
        # No transpose, no pad, no slice: stay at the ~12 B/point HBM minimum.
        return my_feature_interleaved(x, block_rows=interleaved_block_rows)
    # General case: one fused slice+transpose XLA pass to (2, N), then stream.
    x01 = jnp.transpose(x[:, :2])
    return my_feature_planar(x01, block_lanes=planar_block_lanes)


if __name__ == "__main__":
    key = jax.random.PRNGKey(0)
    k1, k2, k3 = jax.random.split(key, 3)

    def ref(x):
        return (-x[:, 0] ** 2 + 1.0) * (-x[:, 1] ** 2 + 1.0)

    # 1) D == 2, N % 128 == 0 -> interleaved fast path (no transpose / pad).
    x1 = jax.random.uniform(k1, (1024, 2), jnp.float32, minval=-1.0, maxval=1.0)
    y1 = my_feature(x1)
    jax.block_until_ready(y1)
    assert y1.shape == (1024,)
    assert jnp.allclose(y1, ref(x1), atol=1e-5, rtol=1e-5)

    # 2) D == 2, multi-tile interleaved grid with a ragged last block.
    x2 = jax.random.uniform(k2, (5120, 2), jnp.float32, minval=-1.0, maxval=1.0)
    y2 = my_feature(x2, interleaved_block_rows=8)
    jax.block_until_ready(y2)
    assert jnp.allclose(y2, ref(x2), atol=1e-5, rtol=1e-5)

    # 3) D > 2 and ragged N -> planar fallback, multi-tile, partial last block.
    x3 = jax.random.uniform(k3, (5000, 3), jnp.float32, minval=-1.0, maxval=1.0)
    y3 = my_feature(x3, planar_block_lanes=512)
    jax.block_until_ready(y3)
    assert y3.shape == (5000,)
    assert jnp.allclose(y3, ref(x3), atol=1e-6, rtol=1e-6)

    # 4) Small ragged N, D == 2 -> planar single (full-extent) block.
    x4 = jax.random.uniform(k1, (200, 2), jnp.float32, minval=-1.0, maxval=1.0)
    y4 = my_feature(x4)
    jax.block_until_ready(y4)
    assert y4.shape == (200,)
    assert jnp.allclose(y4, ref(x4), atol=1e-6, rtol=1e-6)

    print("KERNEL_OK")
</pallas_src>

<mosaic_0001>
module attributes {stable_mosaic.version = 11 : i64} {
  func.func @_interleaved_kernel(%arg0: i32, %arg1: memref<8x256xf32, #tpu.memory_space<vmem>>, %arg2: memref<8x128xf32, #tpu.memory_space<vmem>>) attributes {dimension_semantics = [#tpu.dimension_semantics<parallel>], iteration_bounds = array<i64: 1>, scalar_prefetch = 0 : i64, scratch_operands = 0 : i64, tpu.core_type = #tpu.core_type<tc>, window_params = [{transform_indices = @transform_0, window_bounds = array<i64: 8, 256>}, {transform_indices = @transform_1, window_bounds = array<i64: 8, 128>}]} {
    %c0 = arith.constant 0 : index
    %c0_0 = arith.constant 0 : index
    %0 = vector.load %arg1[%c0, %c0_0] : memref<8x256xf32, #tpu.memory_space<vmem>>, vector<8x256xf32>
    %1 = arith.mulf %0, %0 : vector<8x256xf32>
    %cst = arith.constant 1.000000e+00 : f32
    %2 = vector.broadcast %cst : f32 to vector<8x256xf32>
    %3 = arith.subf %2, %1 : vector<8x256xf32>
    %4 = tpu.iota {dimensions = array<i32: 0>} : vector<256x128xi32>
    %5 = tpu.iota {dimensions = array<i32: 1>} : vector<256x128xi32>
    %c2_i32 = arith.constant 2 : i32
    %6 = vector.broadcast %c2_i32 : i32 to vector<256x128xi32>
    %7 = arith.muli %6, %5 : vector<256x128xi32>
    %8 = arith.cmpi eq, %4, %7 : vector<256x128xi32>
    %9 = arith.extui %8 : vector<256x128xi1> to vector<256x128xi32>
    %10 = arith.sitofp %9 : vector<256x128xi32> to vector<256x128xf32>
    %c2_i32_1 = arith.constant 2 : i32
    %11 = vector.broadcast %c2_i32_1 : i32 to vector<256x128xi32>
    %12 = arith.muli %11, %5 : vector<256x128xi32>
    %c1_i32 = arith.constant 1 : i32
    %13 = vector.broadcast %c1_i32 : i32 to vector<256x128xi32>
    %14 = arith.addi %12, %13 : vector<256x128xi32>
    %15 = arith.cmpi eq, %4, %14 : vector<256x128xi32>
    %16 = arith.extui %15 : vector<256x128xi1> to vector<256x128xi32>
    %17 = arith.sitofp %16 : vector<256x128xi32> to vector<256x128xf32>
    %cst_2 = arith.constant dense<0.000000e+00> : vector<8x128xf32>
    %18 = tpu.matmul %3, %10, %cst_2 {dimension_numbers = #tpu.dot_dimension_numbers<[1], [0], [0], [1], [0, 0, 1, 1], [], []>, precision = #tpu.contract_precision<fp32>} : vector<8x256xf32>, vector<256x128xf32>, vector<8x128xf32> -> vector<8x128xf32>
    %cst_3 = arith.constant dense<0.000000e+00> : vector<8x128xf32>
    %19 = tpu.matmul %3, %17, %cst_3 {dimension_numbers = #tpu.dot_dimension_numbers<[1], [0], [0], [1], [0, 0, 1, 1], [], []>, precision = #tpu.contract_precision<fp32>} : vector<8x256xf32>, vector<256x128xf32>, vector<8x128xf32> -> vector<8x128xf32>
    %20 = arith.mulf %18, %19 : vector<8x128xf32>
    %c0_4 = arith.constant 0 : index
    %c0_5 = arith.constant 0 : index
    %21 = vector.load %arg2[%c0_4, %c0_5] : memref<8x128xf32, #tpu.memory_space<vmem>>, vector<8x128xf32>
    tpu.vector_store %arg2[%c0_4, %c0_5], %20 {strides = array<i32>} : memref<8x128xf32, #tpu.memory_space<vmem>>, vector<8x128xf32>,
    return
  }
  func.func @transform_0(%arg0: i32) -> (i32, i32) {
    %c0_i32 = arith.constant 0 : i32
    %c0_i32_0 = arith.constant 0 : i32
    return %arg0, %c0_i32 : i32, i32
  }
  func.func @transform_1(%arg0: i32) -> (i32, i32) {
    %c0_i32 = arith.constant 0 : i32
    %c0_i32_0 = arith.constant 0 : i32
    return %arg0, %c0_i32 : i32, i32
  }
}

</mosaic_0001>

<llo_original>
// kernel: tpu_custom_call.1
$region0: #{tpu_custom_call.1}
  #allocation0 [shape = 'u32[]', space=smem, size = 0x4, offset = 0x4, fixed_abs, tag = 'smem constant byte address 0x4 - core index']
  #allocation1 [shape = 'u32[144,128]{1,0:T(1,128)}', space=vmem, size = 0x12000, scoped, tag = 'internal scratch']
  %s0 = inlined_call_operand.hbm [shape: f32[8,256], index: 0, kind: input, shape index: {}]
  %s1 = inlined_call_operand.hbm [shape: f32[8,128], index: 1, kind: output, shape index: {}]
  %s2 = sld [smem:[#allocation0]]
  $region18: #{tpu_custom_call.1} parent=0
    _
  %s4 = ssub.s32 1, %s2
  %s5 = scalar_select 0, %s4, %s2
  $region1: #{tpu_custom_call.1} parent=0
    #allocation2 [shape = 'u8[8192]{0}', space=vmem, size = 0x2000, scoped, tag = 'input window, operand 0, single buffered']
    #allocation3 [shape = 's32[1]{0}', space=sflag, size = 0x4, scoped, tag = 'scoped memory for tpu_custom_call.1']
    #allocation4 [shape = 's32[1]{0}', space=sflag, size = 0x4, scoped, tag = 'scoped memory for tpu_custom_call.1']
    #allocation5 [shape = 'u8[4096]{0}', space=vmem, size = 0x1000, scoped, tag = 'output window, operand 0, single buffered']
    %6 = vsyncpa [#allocation3], 0
    %7 = vsyncpa [#allocation4], 0
    // Predicated region
    $region2: #{tpu_custom_call.1} parent=1 // pred_check
      _
    $region3: #{tpu_custom_call.1} parent=1 // pred_check_branch
      %9 = sbr.rel (0) target = $region5
    $region4: #{tpu_custom_call.1} parent=1 // pred_region
      %s11 = ssub.s32 256, 256
      %12 = vsyncadd [#allocation3], %s11
      %s14 = sshll.u32 [#allocation2], 4
      %s15 = int_to_ptr.vmem [resolvable:$true] %s14
      %17 = dma.hbm_to_vmem [thread:$0]  %s0, 256, %s15, [#allocation3]
    $region5: #{tpu_custom_call.1} parent=1 // pred_fallthru
      _
    // Predicated region
    $region6: #{tpu_custom_call.1} parent=1 // pred_check
      _
    $region7: #{tpu_custom_call.1} parent=1 // pred_check_branch
      %19 = sbr.rel (0) target = $region9
    $region8: #{tpu_custom_call.1} parent=1 // pred_region
      %20 = dma.done [#allocation3], 256
    $region9: #{tpu_custom_call.1} parent=1 // pred_fallthru
      _
    %v21 = vld [vmem:[#allocation2] sm:$0xff]
    %v22 = vld [vmem:[#allocation2 + $0x8] sm:$0xff]
    %v23 = vmul.f32 %v21, %v21
    %v24 = vmul.f32 %v22, %v22
    %v25 = vsub.f32 1.0, %v23
    %v26 = vsub.f32 1.0, %v24
    %v27 = vlaneseq
    %v28 = vshrl.u32 %v27, 7
    %v29 = vadd.s32 %v28, 8
    %v30 = vadd.s32 %v28, 16
    %v31 = vadd.s32 %v28, 24
    %v32 = vadd.s32 %v28, 32
    %v33 = vadd.s32 %v28, 40
    %v34 = vadd.s32 %v28, 48
    %v35 = vadd.s32 %v28, 56
    %v36 = vadd.s32 %v28, 64
    %v37 = vadd.s32 %v28, 72
    %v38 = vadd.s32 %v28, 80
    %v39 = vadd.s32 %v28, 88
    %v40 = vadd.s32 %v28, 96
    %v41 = vadd.s32 %v28, 104
    %v42 = vadd.s32 %v28, 112
    %v43 = vadd.s32 %v28, 120
    %v44 = vadd.s32 %v28, 128
    %v45 = vadd.s32 %v28, 136
    %v46 = vadd.s32 %v28, 144
    %v47 = vadd.s32 %v28, 152
    %v48 = vadd.s32 %v28, 160
    %v49 = vadd.s32 %v28, 168
    %v50 = vadd.s32 %v28, 176
    %v51 = vadd.s32 %v28, 184
    %v52 = vadd.s32 %v28, 192
    %v53 = vadd.s32 %v28, 200
    %v54 = vadd.s32 %v28, 208
    %v55 = vadd.s32 %v28, 216
    %v56 = vadd.s32 %v28, 224
    %v57 = vadd.s32 %v28, 232
    %v58 = vadd.s32 %v28, 240
    %v59 = vadd.s32 %v28, 248
    %v60 = vlaneseq
    %v61 = vand.u32 %v60, 127
    %v62 = vmul.u32 %v61, 2
    %vm63 = vcmp.eq.s32.totalorder %v28, %v62
    %vm64 = vcmp.eq.s32.totalorder %v29, %v62
    %vm65 = vcmp.eq.s32.totalorder %v30, %v62
    %vm66 = vcmp.eq.s32.totalorder %v31, %v62
    %vm67 = vcmp.eq.s32.totalorder %v32, %v62
    %vm68 = vcmp.eq.s32.totalorder %v33, %v62
    %vm69 = vcmp.eq.s32.totalorder %v34, %v62
    %vm70 = vcmp.eq.s32.totalorder %v35, %v62
    %vm71 = vcmp.eq.s32.totalorder %v36, %v62
    %vm72 = vcmp.eq.s32.totalorder %v37, %v62
    %vm73 = vcmp.eq.s32.totalorder %v38, %v62
    %vm74 = vcmp.eq.s32.totalorder %v39, %v62
    %vm75 = vcmp.eq.s32.totalorder %v40, %v62
    %vm76 = vcmp.eq.s32.totalorder %v41, %v62
    %vm77 = vcmp.eq.s32.totalorder %v42, %v62
    %vm78 = vcmp.eq.s32.totalorder %v43, %v62
    %vm79 = vcmp.eq.s32.totalorder %v44, %v62
    %vm80 = vcmp.eq.s32.totalorder %v45, %v62
    %vm81 = vcmp.eq.s32.totalorder %v46, %v62
    %vm82 = vcmp.eq.s32.totalorder %v47, %v62
    %vm83 = vcmp.eq.s32.totalorder %v48, %v62
    %vm84 = vcmp.eq.s32.totalorder %v49, %v62
    %vm85 = vcmp.eq.s32.totalorder %v50, %v62
    %vm86 = vcmp.eq.s32.totalorder %v51, %v62
    %vm87 = vcmp.eq.s32.totalorder %v52, %v62
    %vm88 = vcmp.eq.s32.totalorder %v53, %v62
    %vm89 = vcmp.eq.s32.totalorder %v54, %v62
    %vm90 = vcmp.eq.s32.totalorder %v55, %v62
    %vm91 = vcmp.eq.s32.totalorder %v56, %v62
    %vm92 = vcmp.eq.s32.totalorder %v57, %v62
    %vm93 = vcmp.eq.s32.totalorder %v58, %v62
    %vm94 = vcmp.eq.s32.totalorder %v59, %v62
    %v95 = vsel %vm63, 1, 0
    %v96 = vsel %vm64, 1, 0
    %v97 = vsel %vm65, 1, 0
    %v98 = vsel %vm66, 1, 0
    %v99 = vsel %vm67, 1, 0
    %v100 = vsel %vm68, 1, 0
    %v101 = vsel %vm69, 1, 0
    %v102 = vsel %vm70, 1, 0
    %v103 = vsel %vm71, 1, 0
    %v104 = vsel %vm72, 1, 0
    %v105 = vsel %vm73, 1, 0
    %v106 = vsel %vm74, 1, 0
    %v107 = vsel %vm75, 1, 0
    %v108 = vsel %vm76, 1, 0
    %v109 = vsel %vm77, 1, 0
    %v110 = vsel %vm78, 1, 0
    %v111 = vsel %vm79, 1, 0
    %v112 = vsel %vm80, 1, 0
    %v113 = vsel %vm81, 1, 0
    %v114 = vsel %vm82, 1, 0
    %v115 = vsel %vm83, 1, 0
    %v116 = vsel %vm84, 1, 0
    %v117 = vsel %vm85, 1, 0
    %v118 = vsel %vm86, 1, 0
    %v119 = vsel %vm87, 1, 0
    %v120 = vsel %vm88, 1, 0
    %v121 = vsel %vm89, 1, 0
    %v122 = vsel %vm90, 1, 0
    %v123 = vsel %vm91, 1, 0
    %v124 = vsel %vm92, 1, 0
    %v125 = vsel %vm93, 1, 0
    %v126 = vsel %vm94, 1, 0
    %v127 = vcvt.s32.f32 %v95
    %v128 = vcvt.s32.f32 %v96
    %v129 = vcvt.s32.f32 %v97
    %v130 = vcvt.s32.f32 %v98
    %v131 = vcvt.s32.f32 %v99
    %v132 = vcvt.s32.f32 %v100
    %v133 = vcvt.s32.f32 %v101
    %v134 = vcvt.s32.f32 %v102
    %v135 = vcvt.s32.f32 %v103
    %v136 = vcvt.s32.f32 %v104
    %v137 = vcvt.s32.f32 %v105
    %v138 = vcvt.s32.f32 %v106
    %v139 = vcvt.s32.f32 %v107
    %v140 = vcvt.s32.f32 %v108
    %v141 = vcvt.s32.f32 %v109
    %v142 = vcvt.s32.f32 %v110
    %v143 = vcvt.s32.f32 %v111
    %v144 = vcvt.s32.f32 %v112
    %v145 = vcvt.s32.f32 %v113
    %v146 = vcvt.s32.f32 %v114
    %v147 = vcvt.s32.f32 %v115
    %v148 = vcvt.s32.f32 %v116
    %v149 = vcvt.s32.f32 %v117
    %v150 = vcvt.s32.f32 %v118
    %v151 = vcvt.s32.f32 %v119
    %v152 = vcvt.s32.f32 %v120
    %v153 = vcvt.s32.f32 %v121
    %v154 = vcvt.s32.f32 %v122
    %v155 = vcvt.s32.f32 %v123
    %v156 = vcvt.s32.f32 %v124
    %v157 = vcvt.s32.f32 %v125
    %v158 = vcvt.s32.f32 %v126
    %v159 = vadd.s32 %v62, 1
    %vm160 = vcmp.eq.s32.totalorder %v28, %v159
    %vm161 = vcmp.eq.s32.totalorder %v29, %v159
    %vm162 = vcmp.eq.s32.totalorder %v30, %v159
    %vm163 = vcmp.eq.s32.totalorder %v31, %v159
    %vm164 = vcmp.eq.s32.totalorder %v32, %v159
    %vm165 = vcmp.eq.s32.totalorder %v33, %v159
    %vm166 = vcmp.eq.s32.totalorder %v34, %v159
    %vm167 = vcmp.eq.s32.totalorder %v35, %v159
    %vm168 = vcmp.eq.s32.totalorder %v36, %v159
    %vm169 = vcmp.eq.s32.totalorder %v37, %v159
    %vm170 = vcmp.eq.s32.totalorder %v38, %v159
    %vm171 = vcmp.eq.s32.totalorder %v39, %v159
    %vm172 = vcmp.eq.s32.totalorder %v40, %v159
    %vm173 = vcmp.eq.s32.totalorder %v41, %v159
    %vm174 = vcmp.eq.s32.totalorder %v42, %v159
    %vm175 = vcmp.eq.s32.totalorder %v43, %v159
    %vm176 = vcmp.eq.s32.totalorder %v44, %v159
    %vm177 = vcmp.eq.s32.totalorder %v45, %v159
    %vm178 = vcmp.eq.s32.totalorder %v46, %v159
    %vm179 = vcmp.eq.s32.totalorder %v47, %v159
    %vm180 = vcmp.eq.s32.totalorder %v48, %v159
    %vm181 = vcmp.eq.s32.totalorder %v49, %v159
    %vm182 = vcmp.eq.s32.totalorder %v50, %v159
    %vm183 = vcmp.eq.s32.totalorder %v51, %v159
    %vm184 = vcmp.eq.s32.totalorder %v52, %v159
    %vm185 = vcmp.eq.s32.totalorder %v53, %v159
    %vm186 = vcmp.eq.s32.totalorder %v54, %v159
    %vm187 = vcmp.eq.s32.totalorder %v55, %v159
    %vm188 = vcmp.eq.s32.totalorder %v56, %v159
    %vm189 = vcmp.eq.s32.totalorder %v57, %v159
    %vm190 = vcmp.eq.s32.totalorder %v58, %v159
    %vm191 = vcmp.eq.s32.totalorder %v59, %v159
    %v192 = vsel %vm160, 1, 0
    %v193 = vsel %vm161, 1, 0
    %v194 = vsel %vm162, 1, 0
    %v195 = vsel %vm163, 1, 0
    %v196 = vsel %vm164, 1, 0
    %v197 = vsel %vm165, 1, 0
    %v198 = vsel %vm166, 1, 0
    %v199 = vsel %vm167, 1, 0
    %v200 = vsel %vm168, 1, 0
    %v201 = vsel %vm169, 1, 0
    %v202 = vsel %vm170, 1, 0
    %v203 = vsel %vm171, 1, 0
    %v204 = vsel %vm172, 1, 0
    %v205 = vsel %vm173, 1, 0
    %v206 = vsel %vm174, 1, 0
    %v207 = vsel %vm175, 1, 0
    %v208 = vsel %vm176, 1, 0
    %v209 = vsel %vm177, 1, 0
    %v210 = vsel %vm178, 1, 0
    %v211 = vsel %vm179, 1, 0
    %v212 = vsel %vm180, 1, 0
    %v213 = vsel %vm181, 1, 0
    %v214 = vsel %vm182, 1, 0
    %v215 = vsel %vm183, 1, 0
    %v216 = vsel %vm184, 1, 0
    %v217 = vsel %vm185, 1, 0
    %v218 = vsel %vm186, 1, 0
    %v219 = vsel %vm187, 1, 0
    %v220 = vsel %vm188, 1, 0
    %v221 = vsel %vm189, 1, 0
    %v222 = vsel %vm190, 1, 0
    %v223 = vsel %vm191, 1, 0
    %v224 = vcvt.s32.f32 %v192
    %v225 = vcvt.s32.f32 %v193
    %v226 = vcvt.s32.f32 %v194
    %v227 = vcvt.s32.f32 %v195
    %v228 = vcvt.s32.f32 %v196
    %v229 = vcvt.s32.f32 %v197
    %v230 = vcvt.s32.f32 %v198
    %v231 = vcvt.s32.f32 %v199
    %v232 = vcvt.s32.f32 %v200
    %v233 = vcvt.s32.f32 %v201
    %v234 = vcvt.s32.f32 %v202
    %v235 = vcvt.s32.f32 %v203
    %v236 = vcvt.s32.f32 %v204
    %v237 = vcvt.s32.f32 %v205
    %v238 = vcvt.s32.f32 %v206
    %v239 = vcvt.s32.f32 %v207
    %v240 = vcvt.s32.f32 %v208
    %v241 = vcvt.s32.f32 %v209
    %v242 = vcvt.s32.f32 %v210
    %v243 = vcvt.s32.f32 %v211
    %v244 = vcvt.s32.f32 %v212
    %v245 = vcvt.s32.f32 %v213
    %v246 = vcvt.s32.f32 %v214
    %v247 = vcvt.s32.f32 %v215
    %v248 = vcvt.s32.f32 %v216
    %v249 = vcvt.s32.f32 %v217
    %v250 = vcvt.s32.f32 %v218
    %v251 = vcvt.s32.f32 %v219
    %v252 = vcvt.s32.f32 %v220
    %v253 = vcvt.s32.f32 %v221
    %v254 = vcvt.s32.f32 %v222
    %v255 = vcvt.s32.f32 %v223
    %256 = vmatprep.subr.mxu0 0.0
    %v257 = vand.u32 %v142, 4294901760
    %258 = vmatpush1.msra.mxu0 %v257
    %259 = vmatprep.subr.mxu0 0.0
    %v260 = vand.u32 %v141, 4294901760
    %261 = vmatpush1.msra.mxu0 %v260
    %262 = vmatprep.subr.mxu0 0.0
    %v263 = vand.u32 %v140, 4294901760
    %264 = vmatpush1.msra.mxu0 %v263
    %265 = vmatprep.subr.mxu0 0.0
    %v266 = vand.u32 %v139, 4294901760
    %267 = vmatpush1.msra.mxu0 %v266
    %268 = vmatprep.subr.mxu0 0.0
    %v269 = vand.u32 %v138, 4294901760
    %270 = vmatpush1.msra.mxu0 %v269
    %271 = vmatprep.subr.mxu0 0.0
    %v272 = vand.u32 %v137, 4294901760
    %273 = vmatpush1.msra.mxu0 %v272
    %274 = vmatprep.subr.mxu0 0.0
    %v275 = vand.u32 %v136, 4294901760
    %276 = vmatpush1.msra.mxu0 %v275
    %277 = vmatprep.subr.mxu0 0.0
    %v278 = vand.u32 %v135, 4294901760
    %279 = vmatpush1.msra.mxu0 %v278
    %280 = vmatprep.subr.mxu0 0.0
    %v281 = vand.u32 %v134, 4294901760
    %282 = vmatpush1.msra.mxu0 %v281
    %283 = vmatprep.subr.mxu0 0.0
    %v284 = vand.u32 %v133, 4294901760
    %285 = vmatpush1.msra.mxu0 %v284
    %286 = vmatprep.subr.mxu0 0.0
    %v287 = vand.u32 %v132, 4294901760
    %288 = vmatpush1.msra.mxu0 %v287
    %289 = vmatprep.subr.mxu0 0.0
    %v290 = vand.u32 %v131, 4294901760
    %291 = vmatpush1.msra.mxu0 %v290
    %292 = vmatprep.subr.mxu0 0.0
    %v293 = vand.u32 %v130, 4294901760
    %294 = vmatpush1.msra.mxu0 %v293
    %295 = vmatprep.subr.mxu0 0.0
    %v296 = vand.u32 %v129, 4294901760
    %297 = vmatpush1.msra.mxu0 %v296
    %298 = vmatprep.subr.mxu0 0.0
    %v299 = vand.u32 %v128, 4294901760
    %300 = vmatpush1.msra.mxu0 %v299
    %301 = vmatprep.subr.mxu0 0.0
    %v302 = vand.u32 %v127, 4294901760
    %303 = vmatpush1.msra.mxu0 %v302
    %304 = vmatprep.subr.mxu0 0.0
    %v305 = vand.u32 %v158, 4294901760
    %306 = vmatpush2.msra.mxu0 %v305
    %307 = vmatprep.subr.mxu0 0.0
    %v308 = vand.u32 %v157, 4294901760
    %309 = vmatpush2.msra.mxu0 %v308
    %310 = vmatprep.subr.mxu0 0.0
    %v311 = vand.u32 %v156, 4294901760
    %312 = vmatpush2.msra.mxu0 %v311
    %313 = vmatprep.subr.mxu0 0.0
    %v314 = vand.u32 %v155, 4294901760
    %315 = vmatpush2.msra.mxu0 %v314
    %316 = vmatprep.subr.mxu0 0.0
    %v317 = vand.u32 %v154, 4294901760
    %318 = vmatpush2.msra.mxu0 %v317
    %319 = vmatprep.subr.mxu0 0.0
    %v320 = vand.u32 %v153, 4294901760
    %321 = vmatpush2.msra.mxu0 %v320
    %322 = vmatprep.subr.mxu0 0.0
    %v323 = vand.u32 %v152, 4294901760
    %324 = vmatpush2.msra.mxu0 %v323
    %325 = vmatprep.subr.mxu0 0.0
    %v326 = vand.u32 %v151, 4294901760
    %327 = vmatpush2.msra.mxu0 %v326
    %328 = vmatprep.subr.mxu0 0.0
    %v329 = vand.u32 %v150, 4294901760
    %330 = vmatpush2.msra.mxu0 %v329
    %331 = vmatprep.subr.mxu0 0.0
    %v332 = vand.u32 %v149, 4294901760
    %333 = vmatpush2.msra.mxu0 %v332
    %334 = vmatprep.subr.mxu0 0.0
    %v335 = vand.u32 %v148, 4294901760
    %336 = vmatpush2.msra.mxu0 %v335
    %337 = vmatprep.subr.mxu0 0.0
    %v338 = vand.u32 %v147, 4294901760
    %339 = vmatpush2.msra.mxu0 %v338
    %340 = vmatprep.subr.mxu0 0.0
    %v341 = vand.u32 %v146, 4294901760
    %342 = vmatpush2.msra.mxu0 %v341
    %343 = vmatprep.subr.mxu0 0.0
    %v344 = vand.u32 %v145, 4294901760
    %345 = vmatpush2.msra.mxu0 %v344
    %346 = vmatprep.subr.mxu0 0.0
    %v347 = vand.u32 %v144, 4294901760
    %348 = vmatpush2.msra.mxu0 %v347
    %349 = vmatprep.subr.mxu0 0.0
    %v350 = vand.u32 %v143, 4294901760
    %351 = vmatpush2.msra.mxu0 %v350
    %v352 = vand.u32 %v26, 4294901760
    %v353 = vsub.f32 %v26, %v352
    %v354 = vand.u32 %v353, 4294901760
    %v355 = vsub.f32 %v353, %v354
    %v356 = vand.u32 %v355, 4294901760
    %357 = vmatprep.mubr.f32.mxu0 %v356
    %v358 = vand.u32 %v25, 4294901760
    %v359 = vsub.f32 %v25, %v358
    %v360 = vand.u32 %v359, 4294901760
    %v361 = vsub.f32 %v359, %v360
    %v362 = vand.u32 %v361, 4294901760
    %363 = vmatmul.mubr.f32.gmra.mxu0 %v362
    %v364 = vpop.f32.mrf.mxu0
    %v365 = vadd.f32 0.0, %v364
    %v366 = vpop.f32.mrf.mxu0
    %367 = vdwg.mxu0
    %368 = vmatprep.subr.mxu0 0.0
    %v369 = vand.u32 %v142, 4294901760
    %v370 = vsub.f32 %v142, %v369
    %v371 = vand.u32 %v370, 4294901760
    %v372 = vsub.f32 %v370, %v371
    %v373 = vand.u32 %v372, 4294901760
    %374 = vmatpush1.msra.mxu0 %v373
    %375 = vmatprep.subr.mxu0 0.0
    %v376 = vand.u32 %v141, 4294901760
    %v377 = vsub.f32 %v141, %v376
    %v378 = vand.u32 %v377, 4294901760
    %v379 = vsub.f32 %v377, %v378
    %v380 = vand.u32 %v379, 4294901760
    %381 = vmatpush1.msra.mxu0 %v380
    %382 = vmatprep.subr.mxu0 0.0
    %v383 = vand.u32 %v140, 4294901760
    %v384 = vsub.f32 %v140, %v383
    %v385 = vand.u32 %v384, 4294901760
    %v386 = vsub.f32 %v384, %v385
    %v387 = vand.u32 %v386, 4294901760
    %388 = vmatpush1.msra.mxu0 %v387
    %389 = vmatprep.subr.mxu0 0.0
    %v390 = vand.u32 %v139, 4294901760
    %v391 = vsub.f32 %v139, %v390
    %v392 = vand.u32 %v391, 4294901760
    %v393 = vsub.f32 %v391, %v392
    %v394 = vand.u32 %v393, 4294901760
    %395 = vmatpush1.msra.mxu0 %v394
    %396 = vmatprep.subr.mxu0 0.0
    %v397 = vand.u32 %v138, 4294901760
    %v398 = vsub.f32 %v138, %v397
    %v399 = vand.u32 %v398, 4294901760
    %v400 = vsub.f32 %v398, %v399
    %v401 = vand.u32 %v400, 4294901760
    %402 = vmatpush1.msra.mxu0 %v401
    %403 = vmatprep.subr.mxu0 0.0
    %v404 = vand.u32 %v137, 4294901760
    %v405 = vsub.f32 %v137, %v404
    %v406 = vand.u32 %v405, 4294901760
    %v407 = vsub.f32 %v405, %v406
    %v408 = vand.u32 %v407, 4294901760
    %409 = vmatpush1.msra.mxu0 %v408
    %410 = vmatprep.subr.mxu0 0.0
    %v411 = vand.u32 %v136, 4294901760
    %v412 = vsub.f32 %v136, %v411
    %v413 = vand.u32 %v412, 4294901760
    %v414 = vsub.f32 %v412, %v413
    %v415 = vand.u32 %v414, 4294901760
    %416 = vmatpush1.msra.mxu0 %v415
    %417 = vmatprep.subr.mxu0 0.0
    %v418 = vand.u32 %v135, 4294901760
    %v419 = vsub.f32 %v135, %v418
    %v420 = vand.u32 %v419, 4294901760
    %v421 = vsub.f32 %v419, %v420
    %v422 = vand.u32 %v421, 4294901760
    %423 = vmatpush1.msra.mxu0 %v422
    %424 = vmatprep.subr.mxu0 0.0
    %v425 = vand.u32 %v134, 4294901760
    %v426 = vsub.f32 %v134, %v425
    %v427 = vand.u32 %v426, 4294901760
    %v428 = vsub.f32 %v426, %v427
    %v429 = vand.u32 %v428, 4294901760
    %430 = vmatpush1.msra.mxu0 %v429
    %431 = vmatprep.subr.mxu0 0.0
    %v432 = vand.u32 %v133, 4294901760
    %v433 = vsub.f32 %v133, %v432
    %v434 = vand.u32 %v433, 4294901760
    %v435 = vsub.f32 %v433, %v434
    %v436 = vand.u32 %v435, 4294901760
    %437 = vmatpush1.msra.mxu0 %v436
    %438 = vmatprep.subr.mxu0 0.0
    %v439 = vand.u32 %v132, 4294901760
    %v440 = vsub.f32 %v132, %v439
    %v441 = vand.u32 %v440, 4294901760
    %v442 = vsub.f32 %v440, %v441
    %v443 = vand.u32 %v442, 4294901760
    %444 = vmatpush1.msra.mxu0 %v443
    %445 = vmatprep.subr.mxu0 0.0
    %v446 = vand.u32 %v131, 4294901760
    %v447 = vsub.f32 %v131, %v446
    %v448 = vand.u32 %v447, 4294901760
    %v449 = vsub.f32 %v447, %v448
    %v450 = vand.u32 %v449, 4294901760
    %451 = vmatpush1.msra.mxu0 %v450
    %452 = vmatprep.subr.mxu0 0.0
    %v453 = vand.u32 %v130, 4294901760
    %v454 = vsub.f32 %v130, %v453
    %v455 = vand.u32 %v454, 4294901760
    %v456 = vsub.f32 %v454, %v455
    %v457 = vand.u32 %v456, 4294901760
    %458 = vmatpush1.msra.mxu0 %v457
    %459 = vmatprep.subr.mxu0 0.0
    %v460 = vand.u32 %v129, 4294901760
    %v461 = vsub.f32 %v129, %v460
    %v462 = vand.u32 %v461, 4294901760
    %v463 = vsub.f32 %v461, %v462
    %v464 = vand.u32 %v463, 4294901760
    %465 = vmatpush1.msra.mxu0 %v464
    %466 = vmatprep.subr.mxu0 0.0
    %v467 = vand.u32 %v128, 4294901760
    %v468 = vsub.f32 %v128, %v467
    %v469 = vand.u32 %v468, 4294901760
    %v470 = vsub.f32 %v468, %v469
    %v471 = vand.u32 %v470, 4294901760
    %472 = vmatpush1.msra.mxu0 %v471
    %473 = vmatprep.subr.mxu0 0.0
    %v474 = vand.u32 %v127, 4294901760
    %v475 = vsub.f32 %v127, %v474
    %v476 = vand.u32 %v475, 4294901760
    %v477 = vsub.f32 %v475, %v476
    %v478 = vand.u32 %v477, 4294901760
    %479 = vmatpush1.msra.mxu0 %v478
    %480 = vmatprep.subr.mxu0 0.0
    %v481 = vand.u32 %v158, 4294901760
    %v482 = vsub.f32 %v158, %v481
    %v483 = vand.u32 %v482, 4294901760
    %v484 = vsub.f32 %v482, %v483
    %v485 = vand.u32 %v484, 4294901760
    %486 = vmatpush2.msra.mxu0 %v485
    %487 = vmatprep.subr.mxu0 0.0
    %v488 = vand.u32 %v157, 4294901760
    %v489 = vsub.f32 %v157, %v488
    %v490 = vand.u32 %v489, 4294901760
    %v491 = vsub.f32 %v489, %v490
    %v492 = vand.u32 %v491, 4294901760
    %493 = vmatpush2.msra.mxu0 %v492
    %494 = vmatprep.subr.mxu0 0.0
    %v495 = vand.u32 %v156, 4294901760
    %v496 = vsub.f32 %v156, %v495
    %v497 = vand.u32 %v496, 4294901760
    %v498 = vsub.f32 %v496, %v497
    %v499 = vand.u32 %v498, 4294901760
    %500 = vmatpush2.msra.mxu0 %v499
    %501 = vmatprep.subr.mxu0 0.0
    %v502 = vand.u32 %v155, 4294901760
    %v503 = vsub.f32 %v155, %v502
    %v504 = vand.u32 %v503, 4294901760
    %v505 = vsub.f32 %v503, %v504
    %v506 = vand.u32 %v505, 4294901760
    %507 = vmatpush2.msra.mxu0 %v506
    %508 = vmatprep.subr.mxu0 0.0
    %v509 = vand.u32 %v154, 4294901760
    %v510 = vsub.f32 %v154, %v509
    %v511 = vand.u32 %v510, 4294901760
    %v512 = vsub.f32 %v510, %v511
    %v513 = vand.u32 %v512, 4294901760
    %514 = vmatpush2.msra.mxu0 %v513
    %515 = vmatprep.subr.mxu0 0.0
    %v516 = vand.u32 %v153, 4294901760
    %v517 = vsub.f32 %v153, %v516
    %v518 = vand.u32 %v517, 4294901760
    %v519 = vsub.f32 %v517, %v518
    %v520 = vand.u32 %v519, 4294901760
    %521 = vmatpush2.msra.mxu0 %v520
    %522 = vmatprep.subr.mxu0 0.0
    %v523 = vand.u32 %v152, 4294901760
    %v524 = vsub.f32 %v152, %v523
    %v525 = vand.u32 %v524, 4294901760
    %v526 = vsub.f32 %v524, %v525
    %v527 = vand.u32 %v526, 4294901760
    %528 = vmatpush2.msra.mxu0 %v527
    %529 = vmatprep.subr.mxu0 0.0
    %v530 = vand.u32 %v151, 4294901760
    %v531 = vsub.f32 %v151, %v530
    %v532 = vand.u32 %v531, 4294901760
    %v533 = vsub.f32 %v531, %v532
    %v534 = vand.u32 %v533, 4294901760
    %535 = vmatpush2.msra.mxu0 %v534
    %536 = vmatprep.subr.mxu0 0.0
    %v537 = vand.u32 %v150, 4294901760
    %v538 = vsub.f32 %v150, %v537
    %v539 = vand.u32 %v538, 4294901760
    %v540 = vsub.f32 %v538, %v539
    %v541 = vand.u32 %v540, 4294901760
    %542 = vmatpush2.msra.mxu0 %v541
    %543 = vmatprep.subr.mxu0 0.0
    %v544 = vand.u32 %v149, 4294901760
    %v545 = vsub.f32 %v149, %v544
    %v546 = vand.u32 %v545, 4294901760
    %v547 = vsub.f32 %v545, %v546
    %v548 = vand.u32 %v547, 4294901760
    %549 = vmatpush2.msra.mxu0 %v548
    %550 = vmatprep.subr.mxu0 0.0
    %v551 = vand.u32 %v148, 4294901760
    %v552 = vsub.f32 %v148, %v551
    %v553 = vand.u32 %v552, 4294901760
    %v554 = vsub.f32 %v552, %v553
    %v555 = vand.u32 %v554, 4294901760
    %556 = vmatpush2.msra.mxu0 %v555
    %557 = vmatprep.subr.mxu0 0.0
    %v558 = vand.u32 %v147, 4294901760
    %v559 = vsub.f32 %v147, %v558
    %v560 = vand.u32 %v559, 4294901760
    %v561 = vsub.f32 %v559, %v560
    %v562 = vand.u32 %v561, 4294901760
    %563 = vmatpush2.msra.mxu0 %v562
    %564 = vmatprep.subr.mxu0 0.0
    %v565 = vand.u32 %v146, 4294901760
    %v566 = vsub.f32 %v146, %v565
    %v567 = vand.u32 %v566, 4294901760
    %v568 = vsub.f32 %v566, %v567
    %v569 = vand.u32 %v568, 4294901760
    %570 = vmatpush2.msra.mxu0 %v569
    %571 = vmatprep.subr.mxu0 0.0
    %v572 = vand.u32 %v145, 4294901760
    %v573 = vsub.f32 %v145, %v572
    %v574 = vand.u32 %v573, 4294901760
    %v575 = vsub.f32 %v573, %v574
    %v576 = vand.u32 %v575, 4294901760
    %577 = vmatpush2.msra.mxu0 %v576
    %578 = vmatprep.subr.mxu0 0.0
    %v579 = vand.u32 %v144, 4294901760
    %v580 = vsub.f32 %v144, %v579
    %v581 = vand.u32 %v580, 4294901760
    %v582 = vsub.f32 %v580, %v581
    %v583 = vand.u32 %v582, 4294901760
    %584 = vmatpush2.msra.mxu0 %v583
    %585 = vmatprep.subr.mxu0 0.0
    %v586 = vand.u32 %v143, 4294901760
    %v587 = vsub.f32 %v143, %v586
    %v588 = vand.u32 %v587, 4294901760
    %v589 = vsub.f32 %v587, %v588
    %v590 = vand.u32 %v589, 4294901760
    %591 = vmatpush2.msra.mxu0 %v590
    %v592 = vand.u32 %v26, 4294901760
    %593 = vmatprep.mubr.f32.mxu0 %v592
    %v594 = vand.u32 %v25, 4294901760
    %595 = vmatmul.mubr.f32.gmra.mxu0 %v594
    %v596 = vpop.f32.mrf.mxu0
    %v597 = vadd.f32 %v365, %v596
    %v598 = vpop.f32.mrf.mxu0
    %599 = vdwg.mxu0
    %600 = vmatprep.subr.mxu0 0.0
    %v601 = vand.u32 %v142, 4294901760
    %v602 = vsub.f32 %v142, %v601
    %603 = vmatpush1.msra.mxu0 %v602
    %604 = vmatprep.subr.mxu0 0.0
    %v605 = vand.u32 %v141, 4294901760
    %v606 = vsub.f32 %v141, %v605
    %607 = vmatpush1.msra.mxu0 %v606
    %608 = vmatprep.subr.mxu0 0.0
    %v609 = vand.u32 %v140, 4294901760
    %v610 = vsub.f32 %v140, %v609
    %611 = vmatpush1.msra.mxu0 %v610
    %612 = vmatprep.subr.mxu0 0.0
    %v613 = vand.u32 %v139, 4294901760
    %v614 = vsub.f32 %v139, %v613
    %615 = vmatpush1.msra.mxu0 %v614
    %616 = vmatprep.subr.mxu0 0.0
    %v617 = vand.u32 %v138, 4294901760
    %v618 = vsub.f32 %v138, %v617
    %619 = vmatpush1.msra.mxu0 %v618
    %620 = vmatprep.subr.mxu0 0.0
    %v621 = vand.u32 %v137, 4294901760
    %v622 = vsub.f32 %v137, %v621
    %623 = vmatpush1.msra.mxu0 %v622
    %624 = vmatprep.subr.mxu0 0.0
    %v625 = vand.u32 %v136, 4294901760
    %v626 = vsub.f32 %v136, %v625
    %627 = vmatpush1.msra.mxu0 %v626
    %628 = vmatprep.subr.mxu0 0.0
    %v629 = vand.u32 %v135, 4294901760
    %v630 = vsub.f32 %v135, %v629
    %631 = vmatpush1.msra.mxu0 %v630
    %632 = vmatprep.subr.mxu0 0.0
    %v633 = vand.u32 %v134, 4294901760
    %v634 = vsub.f32 %v134, %v633
    %635 = vmatpush1.msra.mxu0 %v634
    %636 = vmatprep.subr.mxu0 0.0
    %v637 = vand.u32 %v133, 4294901760
    %v638 = vsub.f32 %v133, %v637
    %639 = vmatpush1.msra.mxu0 %v638
    %640 = vmatprep.subr.mxu0 0.0
    %v641 = vand.u32 %v132, 4294901760
    %v642 = vsub.f32 %v132, %v641
    %643 = vmatpush1.msra.mxu0 %v642
    %644 = vmatprep.subr.mxu0 0.0
    %v645 = vand.u32 %v131, 4294901760
    %v646 = vsub.f32 %v131, %v645
    %647 = vmatpush1.msra.mxu0 %v646
    %648 = vmatprep.subr.mxu0 0.0
    %v649 = vand.u32 %v130, 4294901760
    %v650 = vsub.f32 %v130, %v649
    %651 = vmatpush1.msra.mxu0 %v650
    %652 = vmatprep.subr.mxu0 0.0
    %v653 = vand.u32 %v129, 4294901760
    %v654 = vsub.f32 %v129, %v653
    %655 = vmatpush1.msra.mxu0 %v654
    %656 = vmatprep.subr.mxu0 0.0
    %v657 = vand.u32 %v128, 4294901760
    %v658 = vsub.f32 %v128, %v657
    %659 = vmatpush1.msra.mxu0 %v658
    %660 = vmatprep.subr.mxu0 0.0
    %v661 = vand.u32 %v127, 4294901760
    %v662 = vsub.f32 %v127, %v661
    %663 = vmatpush1.msra.mxu0 %v662
    %664 = vmatprep.subr.mxu0 0.0
    %v665 = vand.u32 %v158, 4294901760
    %v666 = vsub.f32 %v158, %v665
    %667 = vmatpush2.msra.mxu0 %v666
    %668 = vmatprep.subr.mxu0 0.0
    %v669 = vand.u32 %v157, 4294901760
    %v670 = vsub.f32 %v157, %v669
    %671 = vmatpush2.msra.mxu0 %v670
    %672 = vmatprep.subr.mxu0 0.0
    %v673 = vand.u32 %v156, 4294901760
    %v674 = vsub.f32 %v156, %v673
    %675 = vmatpush2.msra.mxu0 %v674
    %676 = vmatprep.subr.mxu0 0.0
    %v677 = vand.u32 %v155, 4294901760
    %v678 = vsub.f32 %v155, %v677
    %679 = vmatpush2.msra.mxu0 %v678
    %680 = vmatprep.subr.mxu0 0.0
    %v681 = vand.u32 %v154, 4294901760
    %v682 = vsub.f32 %v154, %v681
    %683 = vmatpush2.msra.mxu0 %v682
    %684 = vmatprep.subr.mxu0 0.0
    %v685 = vand.u32 %v153, 4294901760
    %v686 = vsub.f32 %v153, %v685
    %687 = vmatpush2.msra.mxu0 %v686
    %688 = vmatprep.subr.mxu0 0.0
    %v689 = vand.u32 %v152, 4294901760
    %v690 = vsub.f32 %v152, %v689
    %691 = vmatpush2.msra.mxu0 %v690
    %692 = vmatprep.subr.mxu0 0.0
    %v693 = vand.u32 %v151, 4294901760
    %v694 = vsub.f32 %v151, %v693
    %695 = vmatpush2.msra.mxu0 %v694
    %696 = vmatprep.subr.mxu0 0.0
    %v697 = vand.u32 %v150, 4294901760
    %v698 = vsub.f32 %v150, %v697
    %699 = vmatpush2.msra.mxu0 %v698
    %700 = vmatprep.subr.mxu0 0.0
    %v701 = vand.u32 %v149, 4294901760
    %v702 = vsub.f32 %v149, %v701
    %703 = vmatpush2.msra.mxu0 %v702
    %704 = vmatprep.subr.mxu0 0.0
    %v705 = vand.u32 %v148, 4294901760
    %v706 = vsub.f32 %v148, %v705
    %707 = vmatpush2.msra.mxu0 %v706
    %708 = vmatprep.subr.mxu0 0.0
    %v709 = vand.u32 %v147, 4294901760
    %v710 = vsub.f32 %v147, %v709
    %711 = vmatpush2.msra.mxu0 %v710
    %712 = vmatprep.subr.mxu0 0.0
    %v713 = vand.u32 %v146, 4294901760
    %v714 = vsub.f32 %v146, %v713
    %715 = vmatpush2.msra.mxu0 %v714
    %716 = vmatprep.subr.mxu0 0.0
    %v717 = vand.u32 %v145, 4294901760
    %v718 = vsub.f32 %v145, %v717
    %719 = vmatpush2.msra.mxu0 %v718
    %720 = vmatprep.subr.mxu0 0.0
    %v721 = vand.u32 %v144, 4294901760
    %v722 = vsub.f32 %v144, %v721
    %723 = vmatpush2.msra.mxu0 %v722
    %724 = vmatprep.subr.mxu0 0.0
    %v725 = vand.u32 %v143, 4294901760
    %v726 = vsub.f32 %v143, %v725
    %727 = vmatpush2.msra.mxu0 %v726
    %v728 = vand.u32 %v26, 4294901760
    %v729 = vsub.f32 %v26, %v728
    %730 = vmatprep.mubr.f32.mxu0 %v729
    %v731 = vand.u32 %v25, 4294901760
    %v732 = vsub.f32 %v25, %v731
    %733 = vmatmul.mubr.f32.gmra.mxu0 %v732
    %v734 = vpop.f32.mrf.mxu0
    %v735 = vadd.f32 %v597, %v734
    %v736 = vpop.f32.mrf.mxu0
    %737 = vdwg.mxu0
    %738 = vmatprep.subr.mxu0 0.0
    %v739 = vand.u32 %v142, 4294901760
    %740 = vmatpush1.msra.mxu0 %v739
    %741 = vmatprep.subr.mxu0 0.0
    %v742 = vand.u32 %v141, 4294901760
    %743 = vmatpush1.msra.mxu0 %v742
    %744 = vmatprep.subr.mxu0 0.0
    %v745 = vand.u32 %v140, 4294901760
    %746 = vmatpush1.msra.mxu0 %v745
    %747 = vmatprep.subr.mxu0 0.0
    %v748 = vand.u32 %v139, 4294901760
    %749 = vmatpush1.msra.mxu0 %v748
    %750 = vmatprep.subr.mxu0 0.0
    %v751 = vand.u32 %v138, 4294901760
    %752 = vmatpush1.msra.mxu0 %v751
    %753 = vmatprep.subr.mxu0 0.0
    %v754 = vand.u32 %v137, 4294901760
    %755 = vmatpush1.msra.mxu0 %v754
    %756 = vmatprep.subr.mxu0 0.0
    %v757 = vand.u32 %v136, 4294901760
    %758 = vmatpush1.msra.mxu0 %v757
    %759 = vmatprep.subr.mxu0 0.0
    %v760 = vand.u32 %v135, 4294901760
    %761 = vmatpush1.msra.mxu0 %v760
    %762 = vmatprep.subr.mxu0 0.0
    %v763 = vand.u32 %v134, 4294901760
    %764 = vmatpush1.msra.mxu0 %v763
    %765 = vmatprep.subr.mxu0 0.0
    %v766 = vand.u32 %v133, 4294901760
    %767 = vmatpush1.msra.mxu0 %v766
    %768 = vmatprep.subr.mxu0 0.0
    %v769 = vand.u32 %v132, 4294901760
    %770 = vmatpush1.msra.mxu0 %v769
    %771 = vmatprep.subr.mxu0 0.0
    %v772 = vand.u32 %v131, 4294901760
    %773 = vmatpush1.msra.mxu0 %v772
    %774 = vmatprep.subr.mxu0 0.0
    %v775 = vand.u32 %v130, 4294901760
    %776 = vmatpush1.msra.mxu0 %v775
    %777 = vmatprep.subr.mxu0 0.0
    %v778 = vand.u32 %v129, 4294901760
    %779 = vmatpush1.msra.mxu0 %v778
    %780 = vmatprep.subr.mxu0 0.0
    %v781 = vand.u32 %v128, 4294901760
    %782 = vmatpush1.msra.mxu0 %v781
    %783 = vmatprep.subr.mxu0 0.0
    %v784 = vand.u32 %v127, 4294901760
    %785 = vmatpush1.msra.mxu0 %v784
    %786 = vmatprep.subr.mxu0 0.0
    %v787 = vand.u32 %v158, 4294901760
    %788 = vmatpush2.msra.mxu0 %v787
    %789 = vmatprep.subr.mxu0 0.0
    %v790 = vand.u32 %v157, 4294901760
    %791 = vmatpush2.msra.mxu0 %v790
    %792 = vmatprep.subr.mxu0 0.0
    %v793 = vand.u32 %v156, 4294901760
    %794 = vmatpush2.msra.mxu0 %v793
    %795 = vmatprep.subr.mxu0 0.0
    %v796 = vand.u32 %v155, 4294901760
    %797 = vmatpush2.msra.mxu0 %v796
    %798 = vmatprep.subr.mxu0 0.0
    %v799 = vand.u32 %v154, 4294901760
    %800 = vmatpush2.msra.mxu0 %v799
    %801 = vmatprep.subr.mxu0 0.0
    %v802 = vand.u32 %v153, 4294901760
    %803 = vmatpush2.msra.mxu0 %v802
    %804 = vmatprep.subr.mxu0 0.0
    %v805 = vand.u32 %v152, 4294901760
    %806 = vmatpush2.msra.mxu0 %v805
    %807 = vmatprep.subr.mxu0 0.0
    %v808 = vand.u32 %v151, 4294901760
    %809 = vmatpush2.msra.mxu0 %v808
    %810 = vmatprep.subr.mxu0 0.0
    %v811 = vand.u32 %v150, 4294901760
    %812 = vmatpush2.msra.mxu0 %v811
    %813 = vmatprep.subr.mxu0 0.0
    %v814 = vand.u32 %v149, 4294901760
    %815 = vmatpush2.msra.mxu0 %v814
    %816 = vmatprep.subr.mxu0 0.0
    %v817 = vand.u32 %v148, 4294901760
    %818 = vmatpush2.msra.mxu0 %v817
    %819 = vmatprep.subr.mxu0 0.0
    %v820 = vand.u32 %v147, 4294901760
    %821 = vmatpush2.msra.mxu0 %v820
    %822 = vmatprep.subr.mxu0 0.0
    %v823 = vand.u32 %v146, 4294901760
    %824 = vmatpush2.msra.mxu0 %v823
    %825 = vmatprep.subr.mxu0 0.0
    %v826 = vand.u32 %v145, 4294901760
    %827 = vmatpush2.msra.mxu0 %v826
    %828 = vmatprep.subr.mxu0 0.0
    %v829 = vand.u32 %v144, 4294901760
    %830 = vmatpush2.msra.mxu0 %v829
    %831 = vmatprep.subr.mxu0 0.0
    %v832 = vand.u32 %v143, 4294901760
    %833 = vmatpush2.msra.mxu0 %v832
    %v834 = vand.u32 %v26, 4294901760
    %v835 = vsub.f32 %v26, %v834
    %v836 = vand.u32 %v835, 4294901760
    %837 = vmatprep.mubr.f32.mxu0 %v836
    %v838 = vand.u32 %v25, 4294901760
    %v839 = vsub.f32 %v25, %v838
    %v840 = vand.u32 %v839, 4294901760
    %841 = vmatmul.mubr.f32.gmra.mxu0 %v840
    %v842 = vpop.f32.mrf.mxu0
    %v843 = vadd.f32 %v735, %v842
    %v844 = vpop.f32.mrf.mxu0
    %845 = vdwg.mxu0
    %846 = vmatprep.subr.mxu0 0.0
    %v847 = vand.u32 %v142, 4294901760
    %v848 = vsub.f32 %v142, %v847
    %v849 = vand.u32 %v848, 4294901760
    %850 = vmatpush1.msra.mxu0 %v849
    %851 = vmatprep.subr.mxu0 0.0
    %v852 = vand.u32 %v141, 4294901760
    %v853 = vsub.f32 %v141, %v852
    %v854 = vand.u32 %v853, 4294901760
    %855 = vmatpush1.msra.mxu0 %v854
    %856 = vmatprep.subr.mxu0 0.0
    %v857 = vand.u32 %v140, 4294901760
    %v858 = vsub.f32 %v140, %v857
    %v859 = vand.u32 %v858, 4294901760
    %860 = vmatpush1.msra.mxu0 %v859
    %861 = vmatprep.subr.mxu0 0.0
    %v862 = vand.u32 %v139, 4294901760
    %v863 = vsub.f32 %v139, %v862
    %v864 = vand.u32 %v863, 4294901760
    %865 = vmatpush1.msra.mxu0 %v864
    %866 = vmatprep.subr.mxu0 0.0
    %v867 = vand.u32 %v138, 4294901760
    %v868 = vsub.f32 %v138, %v867
    %v869 = vand.u32 %v868, 4294901760
    %870 = vmatpush1.msra.mxu0 %v869
    %871 = vmatprep.subr.mxu0 0.0
    %v872 = vand.u32 %v137, 4294901760
    %v873 = vsub.f32 %v137, %v872
    %v874 = vand.u32 %v873, 4294901760
    %875 = vmatpush1.msra.mxu0 %v874
    %876 = vmatprep.subr.mxu0 0.0
    %v877 = vand.u32 %v136, 4294901760
    %v878 = vsub.f32 %v136, %v877
    %v879 = vand.u32 %v878, 4294901760
    %880 = vmatpush1.msra.mxu0 %v879
    %881 = vmatprep.subr.mxu0 0.0
    %v882 = vand.u32 %v135, 4294901760
    %v883 = vsub.f32 %v135, %v882
    %v884 = vand.u32 %v883, 4294901760
    %885 = vmatpush1.msra.mxu0 %v884
    %886 = vmatprep.subr.mxu0 0.0
    %v887 = vand.u32 %v134, 4294901760
    %v888 = vsub.f32 %v134, %v887
    %v889 = vand.u32 %v888, 4294901760
    %890 = vmatpush1.msra.mxu0 %v889
    %891 = vmatprep.subr.mxu0 0.0
    %v892 = vand.u32 %v133, 4294901760
    %v893 = vsub.f32 %v133, %v892
    %v894 = vand.u32 %v893, 4294901760
    %895 = vmatpush1.msra.mxu0 %v894
    %896 = vmatprep.subr.mxu0 0.0
    %v897 = vand.u32 %v132, 4294901760
    %v898 = vsub.f32 %v132, %v897
    %v899 = vand.u32 %v898, 4294901760
    %900 = vmatpush1.msra.mxu0 %v899
    %901 = vmatprep.subr.mxu0 0.0
    %v902 = vand.u32 %v131, 4294901760
    %v903 = vsub.f32 %v131, %v902
    %v904 = vand.u32 %v903, 4294901760
    %905 = vmatpush1.msra.mxu0 %v904
    %906 = vmatprep.subr.mxu0 0.0
    %v907 = vand.u32 %v130, 4294901760
    %v908 = vsub.f32 %v130, %v907
    %v909 = vand.u32 %v908, 4294901760
    %910 = vmatpush1.msra.mxu0 %v909
    %911 = vmatprep.subr.mxu0 0.0
    %v912 = vand.u32 %v129, 4294901760
    %v913 = vsub.f32 %v129, %v912
    %v914 = vand.u32 %v913, 4294901760
    %915 = vmatpush1.msra.mxu0 %v914
    %916 = vmatprep.subr.mxu0 0.0
    %v917 = vand.u32 %v128, 4294901760
    %v918 = vsub.f32 %v128, %v917
    %v919 = vand.u32 %v918, 4294901760
    %920 = vmatpush1.msra.mxu0 %v919
    %921 = vmatprep.subr.mxu0 0.0
    %v922 = vand.u32 %v127, 4294901760
    %v923 = vsub.f32 %v127, %v922
    %v924 = vand.u32 %v923, 4294901760
    %925 = vmatpush1.msra.mxu0 %v924
    %926 = vmatprep.subr.mxu0 0.0
    %v927 = vand.u32 %v158, 4294901760
    %v928 = vsub.f32 %v158, %v927
    %v929 = vand.u32 %v928, 4294901760
    %930 = vmatpush2.msra.mxu0 %v929
    %931 = vmatprep.subr.mxu0 0.0
    %v932 = vand.u32 %v157, 4294901760
    %v933 = vsub.f32 %v157, %v932
    %v934 = vand.u32 %v933, 4294901760
    %935 = vmatpush2.msra.mxu0 %v934
    %936 = vmatprep.subr.mxu0 0.0
    %v937 = vand.u32 %v156, 4294901760
    %v938 = vsub.f32 %v156, %v937
    %v939 = vand.u32 %v938, 4294901760
    %940 = vmatpush2.msra.mxu0 %v939
    %941 = vmatprep.subr.mxu0 0.0
    %v942 = vand.u32 %v155, 4294901760
    %v943 = vsub.f32 %v155, %v942
    %v944 = vand.u32 %v943, 4294901760
    %945 = vmatpush2.msra.mxu0 %v944
    %946 = vmatprep.subr.mxu0 0.0
    %v947 = vand.u32 %v154, 4294901760
    %v948 = vsub.f32 %v154, %v947
    %v949 = vand.u32 %v948, 4294901760
    %950 = vmatpush2.msra.mxu0 %v949
    %951 = vmatprep.subr.mxu0 0.0
    %v952 = vand.u32 %v153, 4294901760
    %v953 = vsub.f32 %v153, %v952
    %v954 = vand.u32 %v953, 4294901760
    %955 = vmatpush2.msra.mxu0 %v954
    %956 = vmatprep.subr.mxu0 0.0
    %v957 = vand.u32 %v152, 4294901760
    %v958 = vsub.f32 %v152, %v957
    %v959 = vand.u32 %v958, 4294901760
    %960 = vmatpush2.msra.mxu0 %v959
    %961 = vmatprep.subr.mxu0 0.0
    %v962 = vand.u32 %v151, 4294901760
    %v963 = vsub.f32 %v151, %v962
    %v964 = vand.u32 %v963, 4294901760
    %965 = vmatpush2.msra.mxu0 %v964
    %966 = vmatprep.subr.mxu0 0.0
    %v967 = vand.u32 %v150, 4294901760
    %v968 = vsub.f32 %v150, %v967
    %v969 = vand.u32 %v968, 4294901760
    %970 = vmatpush2.msra.mxu0 %v969
    %971 = vmatprep.subr.mxu0 0.0
    %v972 = vand.u32 %v149, 4294901760
    %v973 = vsub.f32 %v149, %v972
    %v974 = vand.u32 %v973, 4294901760
    %975 = vmatpush2.msra.mxu0 %v974
    %976 = vmatprep.subr.mxu0 0.0
    %v977 = vand.u32 %v148, 4294901760
    %v978 = vsub.f32 %v148, %v977
    %v979 = vand.u32 %v978, 4294901760
    %980 = vmatpush2.msra.mxu0 %v979
    %981 = vmatprep.subr.mxu0 0.0
    %v982 = vand.u32 %v147, 4294901760
    %v983 = vsub.f32 %v147, %v982
    %v984 = vand.u32 %v983, 4294901760
    %985 = vmatpush2.msra.mxu0 %v984
    %986 = vmatprep.subr.mxu0 0.0
    %v987 = vand.u32 %v146, 4294901760
    %v988 = vsub.f32 %v146, %v987
    %v989 = vand.u32 %v988, 4294901760
    %990 = vmatpush2.msra.mxu0 %v989
    %991 = vmatprep.subr.mxu0 0.0
    %v992 = vand.u32 %v145, 4294901760
    %v993 = vsub.f32 %v145, %v992
    %v994 = vand.u32 %v993, 4294901760
    %995 = vmatpush2.msra.mxu0 %v994
    %996 = vmatprep.subr.mxu0 0.0
    %v997 = vand.u32 %v144, 4294901760
    %v998 = vsub.f32 %v144, %v997
    %v999 = vand.u32 %v998, 4294901760
    %1000 = vmatpush2.msra.mxu0 %v999
    %1001 = vmatprep.subr.mxu0 0.0
    %v1002 = vand.u32 %v143, 4294901760
    %v1003 = vsub.f32 %v143, %v1002
    %v1004 = vand.u32 %v1003, 4294901760
    %1005 = vmatpush2.msra.mxu0 %v1004
    %v1006 = vand.u32 %v26, 4294901760
    %1007 = vmatprep.mubr.f32.mxu0 %v1006
    %v1008 = vand.u32 %v25, 4294901760
    %1009 = vmatmul.mubr.f32.gmra.mxu0 %v1008
    %v1010 = vpop.f32.mrf.mxu0
    %v1011 = vadd.f32 %v843, %v1010
    %v1012 = vpop.f32.mrf.mxu0
    %1013 = vdwg.mxu0
    %1014 = vmatprep.subr.mxu0 0.0
    %v1015 = vand.u32 %v142, 4294901760
    %1016 = vmatpush1.msra.mxu0 %v1015
    %1017 = vmatprep.subr.mxu0 0.0
    %v1018 = vand.u32 %v141, 4294901760
    %1019 = vmatpush1.msra.mxu0 %v1018
    %1020 = vmatprep.subr.mxu0 0.0
    %v1021 = vand.u32 %v140, 4294901760
    %1022 = vmatpush1.msra.mxu0 %v1021
    %1023 = vmatprep.subr.mxu0 0.0
    %v1024 = vand.u32 %v139, 4294901760
    %1025 = vmatpush1.msra.mxu0 %v1024
    %1026 = vmatprep.subr.mxu0 0.0
    %v1027 = vand.u32 %v138, 4294901760
    %1028 = vmatpush1.msra.mxu0 %v1027
    %1029 = vmatprep.subr.mxu0 0.0
    %v1030 = vand.u32 %v137, 4294901760
    %1031 = vmatpush1.msra.mxu0 %v1030
    %1032 = vmatprep.subr.mxu0 0.0
    %v1033 = vand.u32 %v136, 4294901760
    %1034 = vmatpush1.msra.mxu0 %v1033
    %1035 = vmatprep.subr.mxu0 0.0
    %v1036 = vand.u32 %v135, 4294901760
    %1037 = vmatpush1.msra.mxu0 %v1036
    %1038 = vmatprep.subr.mxu0 0.0
    %v1039 = vand.u32 %v134, 4294901760
    %1040 = vmatpush1.msra.mxu0 %v1039
    %1041 = vmatprep.subr.mxu0 0.0
    %v1042 = vand.u32 %v133, 4294901760
    %1043 = vmatpush1.msra.mxu0 %v1042
    %1044 = vmatprep.subr.mxu0 0.0
    %v1045 = vand.u32 %v132, 4294901760
    %1046 = vmatpush1.msra.mxu0 %v1045
    %1047 = vmatprep.subr.mxu0 0.0
    %v1048 = vand.u32 %v131, 4294901760
    %1049 = vmatpush1.msra.mxu0 %v1048
    %1050 = vmatprep.subr.mxu0 0.0
    %v1051 = vand.u32 %v130, 4294901760
    %1052 = vmatpush1.msra.mxu0 %v1051
    %1053 = vmatprep.subr.mxu0 0.0
    %v1054 = vand.u32 %v129, 4294901760
    %1055 = vmatpush1.msra.mxu0 %v1054
    %1056 = vmatprep.subr.mxu0 0.0
    %v1057 = vand.u32 %v128, 4294901760
    %1058 = vmatpush1.msra.mxu0 %v1057
    %1059 = vmatprep.subr.mxu0 0.0
    %v1060 = vand.u32 %v127, 4294901760
    %1061 = vmatpush1.msra.mxu0 %v1060
    %1062 = vmatprep.subr.mxu0 0.0
    %v1063 = vand.u32 %v158, 4294901760
    %1064 = vmatpush2.msra.mxu0 %v1063
    %1065 = vmatprep.subr.mxu0 0.0
    %v1066 = vand.u32 %v157, 4294901760
    %1067 = vmatpush2.msra.mxu0 %v1066
    %1068 = vmatprep.subr.mxu0 0.0
    %v1069 = vand.u32 %v156, 4294901760
    %1070 = vmatpush2.msra.mxu0 %v1069
    %1071 = vmatprep.subr.mxu0 0.0
    %v1072 = vand.u32 %v155, 4294901760
    %1073 = vmatpush2.msra.mxu0 %v1072
    %1074 = vmatprep.subr.mxu0 0.0
    %v1075 = vand.u32 %v154, 4294901760
    %1076 = vmatpush2.msra.mxu0 %v1075
    %1077 = vmatprep.subr.mxu0 0.0
    %v1078 = vand.u32 %v153, 4294901760
    %1079 = vmatpush2.msra.mxu0 %v1078
    %1080 = vmatprep.subr.mxu0 0.0
    %v1081 = vand.u32 %v152, 4294901760
    %1082 = vmatpush2.msra.mxu0 %v1081
    %1083 = vmatprep.subr.mxu0 0.0
    %v1084 = vand.u32 %v151, 4294901760
    %1085 = vmatpush2.msra.mxu0 %v1084
    %1086 = vmatprep.subr.mxu0 0.0
    %v1087 = vand.u32 %v150, 4294901760
    %1088 = vmatpush2.msra.mxu0 %v1087
    %1089 = vmatprep.subr.mxu0 0.0
    %v1090 = vand.u32 %v149, 4294901760
    %1091 = vmatpush2.msra.mxu0 %v1090
    %1092 = vmatprep.subr.mxu0 0.0
    %v1093 = vand.u32 %v148, 4294901760
    %1094 = vmatpush2.msra.mxu0 %v1093
    %1095 = vmatprep.subr.mxu0 0.0
    %v1096 = vand.u32 %v147, 4294901760
    %1097 = vmatpush2.msra.mxu0 %v1096
    %1098 = vmatprep.subr.mxu0 0.0
    %v1099 = vand.u32 %v146, 4294901760
    %1100 = vmatpush2.msra.mxu0 %v1099
    %1101 = vmatprep.subr.mxu0 0.0
    %v1102 = vand.u32 %v145, 4294901760
    %1103 = vmatpush2.msra.mxu0 %v1102
    %1104 = vmatprep.subr.mxu0 0.0
    %v1105 = vand.u32 %v144, 4294901760
    %1106 = vmatpush2.msra.mxu0 %v1105
    %1107 = vmatprep.subr.mxu0 0.0
    %v1108 = vand.u32 %v143, 4294901760
    %1109 = vmatpush2.msra.mxu0 %v1108
    %v1110 = vand.u32 %v26, 4294901760
    %1111 = vmatprep.mubr.f32.mxu0 %v1110
    %v1112 = vand.u32 %v25, 4294901760
    %1113 = vmatmul.mubr.f32.gmra.mxu0 %v1112
    %v1114 = vpop.f32.mrf.mxu0
    %v1115 = vadd.f32 %v1011, %v1114
    %v1116 = vpop.f32.mrf.mxu0
    %1117 = vdwg.mxu0
    %1118 = vmatprep.subr.mxu0 0.0
    %v1119 = vand.u32 %v239, 4294901760
    %1120 = vmatpush1.msra.mxu0 %v1119
    %1121 = vmatprep.subr.mxu0 0.0
    %v1122 = vand.u32 %v238, 4294901760
    %1123 = vmatpush1.msra.mxu0 %v1122
    %1124 = vmatprep.subr.mxu0 0.0
    %v1125 = vand.u32 %v237, 4294901760
    %1126 = vmatpush1.msra.mxu0 %v1125
    %1127 = vmatprep.subr.mxu0 0.0
    %v1128 = vand.u32 %v236, 4294901760
    %1129 = vmatpush1.msra.mxu0 %v1128
    %1130 = vmatprep.subr.mxu0 0.0
    %v1131 = vand.u32 %v235, 4294901760
    %1132 = vmatpush1.msra.mxu0 %v1131
    %1133 = vmatprep.subr.mxu0 0.0
    %v1134 = vand.u32 %v234, 4294901760
    %1135 = vmatpush1.msra.mxu0 %v1134
    %1136 = vmatprep.subr.mxu0 0.0
    %v1137 = vand.u32 %v233, 4294901760
    %1138 = vmatpush1.msra.mxu0 %v1137
    %1139 = vmatprep.subr.mxu0 0.0
    %v1140 = vand.u32 %v232, 4294901760
    %1141 = vmatpush1.msra.mxu0 %v1140
    %1142 = vmatprep.subr.mxu0 0.0
    %v1143 = vand.u32 %v231, 4294901760
    %1144 = vmatpush1.msra.mxu0 %v1143
    %1145 = vmatprep.subr.mxu0 0.0
    %v1146 = vand.u32 %v230, 4294901760
    %1147 = vmatpush1.msra.mxu0 %v1146
    %1148 = vmatprep.subr.mxu0 0.0
    %v1149 = vand.u32 %v229, 4294901760
    %1150 = vmatpush1.msra.mxu0 %v1149
    %1151 = vmatprep.subr.mxu0 0.0
    %v1152 = vand.u32 %v228, 4294901760
    %1153 = vmatpush1.msra.mxu0 %v1152
    %1154 = vmatprep.subr.mxu0 0.0
    %v1155 = vand.u32 %v227, 4294901760
    %1156 = vmatpush1.msra.mxu0 %v1155
    %1157 = vmatprep.subr.mxu0 0.0
    %v1158 = vand.u32 %v226, 4294901760
    %1159 = vmatpush1.msra.mxu0 %v1158
    %1160 = vmatprep.subr.mxu0 0.0
    %v1161 = vand.u32 %v225, 4294901760
    %1162 = vmatpush1.msra.mxu0 %v1161
    %1163 = vmatprep.subr.mxu0 0.0
    %v1164 = vand.u32 %v224, 4294901760
    %1165 = vmatpush1.msra.mxu0 %v1164
    %1166 = vmatprep.subr.mxu0 0.0
    %v1167 = vand.u32 %v255, 4294901760
    %1168 = vmatpush2.msra.mxu0 %v1167
    %1169 = vmatprep.subr.mxu0 0.0
    %v1170 = vand.u32 %v254, 4294901760
    %1171 = vmatpush2.msra.mxu0 %v1170
    %1172 = vmatprep.subr.mxu0 0.0
    %v1173 = vand.u32 %v253, 4294901760
    %1174 = vmatpush2.msra.mxu0 %v1173
    %1175 = vmatprep.subr.mxu0 0.0
    %v1176 = vand.u32 %v252, 4294901760
    %1177 = vmatpush2.msra.mxu0 %v1176
    %1178 = vmatprep.subr.mxu0 0.0
    %v1179 = vand.u32 %v251, 4294901760
    %1180 = vmatpush2.msra.mxu0 %v1179
    %1181 = vmatprep.subr.mxu0 0.0
    %v1182 = vand.u32 %v250, 4294901760
    %1183 = vmatpush2.msra.mxu0 %v1182
    %1184 = vmatprep.subr.mxu0 0.0
    %v1185 = vand.u32 %v249, 4294901760
    %1186 = vmatpush2.msra.mxu0 %v1185
    %1187 = vmatprep.subr.mxu0 0.0
    %v1188 = vand.u32 %v248, 4294901760
    %1189 = vmatpush2.msra.mxu0 %v1188
    %1190 = vmatprep.subr.mxu0 0.0
    %v1191 = vand.u32 %v247, 4294901760
    %1192 = vmatpush2.msra.mxu0 %v1191
    %1193 = vmatprep.subr.mxu0 0.0
    %v1194 = vand.u32 %v246, 4294901760
    %1195 = vmatpush2.msra.mxu0 %v1194
    %1196 = vmatprep.subr.mxu0 0.0
    %v1197 = vand.u32 %v245, 4294901760
    %1198 = vmatpush2.msra.mxu0 %v1197
    %1199 = vmatprep.subr.mxu0 0.0
    %v1200 = vand.u32 %v244, 4294901760
    %1201 = vmatpush2.msra.mxu0 %v1200
    %1202 = vmatprep.subr.mxu0 0.0
    %v1203 = vand.u32 %v243, 4294901760
    %1204 = vmatpush2.msra.mxu0 %v1203
    %1205 = vmatprep.subr.mxu0 0.0
    %v1206 = vand.u32 %v242, 4294901760
    %1207 = vmatpush2.msra.mxu0 %v1206
    %1208 = vmatprep.subr.mxu0 0.0
    %v1209 = vand.u32 %v241, 4294901760
    %1210 = vmatpush2.msra.mxu0 %v1209
    %1211 = vmatprep.subr.mxu0 0.0
    %v1212 = vand.u32 %v240, 4294901760
    %1213 = vmatpush2.msra.mxu0 %v1212
    %v1214 = vand.u32 %v26, 4294901760
    %v1215 = vsub.f32 %v26, %v1214
    %v1216 = vand.u32 %v1215, 4294901760
    %v1217 = vsub.f32 %v1215, %v1216
    %v1218 = vand.u32 %v1217, 4294901760
    %1219 = vmatprep.mubr.f32.mxu0 %v1218
    %v1220 = vand.u32 %v25, 4294901760
    %v1221 = vsub.f32 %v25, %v1220
    %v1222 = vand.u32 %v1221, 4294901760
    %v1223 = vsub.f32 %v1221, %v1222
    %v1224 = vand.u32 %v1223, 4294901760
    %1225 = vmatmul.mubr.f32.gmra.mxu0 %v1224
    %v1226 = vpop.f32.mrf.mxu0
    %v1227 = vadd.f32 0.0, %v1226
    %v1228 = vpop.f32.mrf.mxu0
    %1229 = vdwg.mxu0
    %1230 = vmatprep.subr.mxu0 0.0
    %v1231 = vand.u32 %v239, 4294901760
    %v1232 = vsub.f32 %v239, %v1231
    %v1233 = vand.u32 %v1232, 4294901760
    %v1234 = vsub.f32 %v1232, %v1233
    %v1235 = vand.u32 %v1234, 4294901760
    %1236 = vmatpush1.msra.mxu0 %v1235
    %1237 = vmatprep.subr.mxu0 0.0
    %v1238 = vand.u32 %v238, 4294901760
    %v1239 = vsub.f32 %v238, %v1238
    %v1240 = vand.u32 %v1239, 4294901760
    %v1241 = vsub.f32 %v1239, %v1240
    %v1242 = vand.u32 %v1241, 4294901760
    %1243 = vmatpush1.msra.mxu0 %v1242
    %1244 = vmatprep.subr.mxu0 0.0
    %v1245 = vand.u32 %v237, 4294901760
    %v1246 = vsub.f32 %v237, %v1245
    %v1247 = vand.u32 %v1246, 4294901760
    %v1248 = vsub.f32 %v1246, %v1247
    %v1249 = vand.u32 %v1248, 4294901760
    %1250 = vmatpush1.msra.mxu0 %v1249
    %1251 = vmatprep.subr.mxu0 0.0
    %v1252 = vand.u32 %v236, 4294901760
    %v1253 = vsub.f32 %v236, %v1252
    %v1254 = vand.u32 %v1253, 4294901760
    %v1255 = vsub.f32 %v1253, %v1254
    %v1256 = vand.u32 %v1255, 4294901760
    %1257 = vmatpush1.msra.mxu0 %v1256
    %1258 = vmatprep.subr.mxu0 0.0
    %v1259 = vand.u32 %v235, 4294901760
    %v1260 = vsub.f32 %v235, %v1259
    %v1261 = vand.u32 %v1260, 4294901760
    %v1262 = vsub.f32 %v1260, %v1261
    %v1263 = vand.u32 %v1262, 4294901760
    %1264 = vmatpush1.msra.mxu0 %v1263
    %1265 = vmatprep.subr.mxu0 0.0
    %v1266 = vand.u32 %v234, 4294901760
    %v1267 = vsub.f32 %v234, %v1266
    %v1268 = vand.u32 %v1267, 4294901760
    %v1269 = vsub.f32 %v1267, %v1268
    %v1270 = vand.u32 %v1269, 4294901760
    %1271 = vmatpush1.msra.mxu0 %v1270
    %1272 = vmatprep.subr.mxu0 0.0
    %v1273 = vand.u32 %v233, 4294901760
    %v1274 = vsub.f32 %v233, %v1273
    %v1275 = vand.u32 %v1274, 4294901760
    %v1276 = vsub.f32 %v1274, %v1275
    %v1277 = vand.u32 %v1276, 4294901760
    %1278 = vmatpush1.msra.mxu0 %v1277
    %1279 = vmatprep.subr.mxu0 0.0
    %v1280 = vand.u32 %v232, 4294901760
    %v1281 = vsub.f32 %v232, %v1280
    %v1282 = vand.u32 %v1281, 4294901760
    %v1283 = vsub.f32 %v1281, %v1282
    %v1284 = vand.u32 %v1283, 4294901760
    %1285 = vmatpush1.msra.mxu0 %v1284
    %1286 = vmatprep.subr.mxu0 0.0
    %v1287 = vand.u32 %v231, 4294901760
    %v1288 = vsub.f32 %v231, %v1287
    %v1289 = vand.u32 %v1288, 4294901760
    %v1290 = vsub.f32 %v1288, %v1289
    %v1291 = vand.u32 %v1290, 4294901760
    %1292 = vmatpush1.msra.mxu0 %v1291
    %1293 = vmatprep.subr.mxu0 0.0
    %v1294 = vand.u32 %v230, 4294901760
    %v1295 = vsub.f32 %v230, %v1294
    %v1296 = vand.u32 %v1295, 4294901760
    %v1297 = vsub.f32 %v1295, %v1296
    %v1298 = vand.u32 %v1297, 4294901760
    %1299 = vmatpush1.msra.mxu0 %v1298
    %1300 = vmatprep.subr.mxu0 0.0
    %v1301 = vand.u32 %v229, 4294901760
    %v1302 = vsub.f32 %v229, %v1301
    %v1303 = vand.u32 %v1302, 4294901760
    %v1304 = vsub.f32 %v1302, %v1303
    %v1305 = vand.u32 %v1304, 4294901760
    %1306 = vmatpush1.msra.mxu0 %v1305
    %1307 = vmatprep.subr.mxu0 0.0
    %v1308 = vand.u32 %v228, 4294901760
    %v1309 = vsub.f32 %v228, %v1308
    %v1310 = vand.u32 %v1309, 4294901760
    %v1311 = vsub.f32 %v1309, %v1310
    %v1312 = vand.u32 %v1311, 4294901760
    %1313 = vmatpush1.msra.mxu0 %v1312
    %1314 = vmatprep.subr.mxu0 0.0
    %v1315 = vand.u32 %v227, 4294901760
    %v1316 = vsub.f32 %v227, %v1315
    %v1317 = vand.u32 %v1316, 4294901760
    %v1318 = vsub.f32 %v1316, %v1317
    %v1319 = vand.u32 %v1318, 4294901760
    %1320 = vmatpush1.msra.mxu0 %v1319
    %1321 = vmatprep.subr.mxu0 0.0
    %v1322 = vand.u32 %v226, 4294901760
    %v1323 = vsub.f32 %v226, %v1322
    %v1324 = vand.u32 %v1323, 4294901760
    %v1325 = vsub.f32 %v1323, %v1324
    %v1326 = vand.u32 %v1325, 4294901760
    %1327 = vmatpush1.msra.mxu0 %v1326
    %1328 = vmatprep.subr.mxu0 0.0
    %v1329 = vand.u32 %v225, 4294901760
    %v1330 = vsub.f32 %v225, %v1329
    %v1331 = vand.u32 %v1330, 4294901760
    %v1332 = vsub.f32 %v1330, %v1331
    %v1333 = vand.u32 %v1332, 4294901760
    %1334 = vmatpush1.msra.mxu0 %v1333
    %1335 = vmatprep.subr.mxu0 0.0
    %v1336 = vand.u32 %v224, 4294901760
    %v1337 = vsub.f32 %v224, %v1336
    %v1338 = vand.u32 %v1337, 4294901760
    %v1339 = vsub.f32 %v1337, %v1338
    %v1340 = vand.u32 %v1339, 4294901760
    %1341 = vmatpush1.msra.mxu0 %v1340
    %1342 = vmatprep.subr.mxu0 0.0
    %v1343 = vand.u32 %v255, 4294901760
    %v1344 = vsub.f32 %v255, %v1343
    %v1345 = vand.u32 %v1344, 4294901760
    %v1346 = vsub.f32 %v1344, %v1345
    %v1347 = vand.u32 %v1346, 4294901760
    %1348 = vmatpush2.msra.mxu0 %v1347
    %1349 = vmatprep.subr.mxu0 0.0
    %v1350 = vand.u32 %v254, 4294901760
    %v1351 = vsub.f32 %v254, %v1350
    %v1352 = vand.u32 %v1351, 4294901760
    %v1353 = vsub.f32 %v1351, %v1352
    %v1354 = vand.u32 %v1353, 4294901760
    %1355 = vmatpush2.msra.mxu0 %v1354
    %1356 = vmatprep.subr.mxu0 0.0
    %v1357 = vand.u32 %v253, 4294901760
    %v1358 = vsub.f32 %v253, %v1357
    %v1359 = vand.u32 %v1358, 4294901760
    %v1360 = vsub.f32 %v1358, %v1359
    %v1361 = vand.u32 %v1360, 4294901760
    %1362 = vmatpush2.msra.mxu0 %v1361
    %1363 = vmatprep.subr.mxu0 0.0
    %v1364 = vand.u32 %v252, 4294901760
    %v1365 = vsub.f32 %v252, %v1364
    %v1366 = vand.u32 %v1365, 4294901760
    %v1367 = vsub.f32 %v1365, %v1366
    %v1368 = vand.u32 %v1367, 4294901760
    %1369 = vmatpush2.msra.mxu0 %v1368
    %1370 = vmatprep.subr.mxu0 0.0
    %v1371 = vand.u32 %v251, 4294901760
    %v1372 = vsub.f32 %v251, %v1371
    %v1373 = vand.u32 %v1372, 4294901760
    %v1374 = vsub.f32 %v1372, %v1373
    %v1375 = vand.u32 %v1374, 4294901760
    %1376 = vmatpush2.msra.mxu0 %v1375
    %1377 = vmatprep.subr.mxu0 0.0
    %v1378 = vand.u32 %v250, 4294901760
    %v1379 = vsub.f32 %v250, %v1378
    %v1380 = vand.u32 %v1379, 4294901760
    %v1381 = vsub.f32 %v1379, %v1380
    %v1382 = vand.u32 %v1381, 4294901760
    %1383 = vmatpush2.msra.mxu0 %v1382
    %1384 = vmatprep.subr.mxu0 0.0
    %v1385 = vand.u32 %v249, 4294901760
    %v1386 = vsub.f32 %v249, %v1385
    %v1387 = vand.u32 %v1386, 4294901760
    %v1388 = vsub.f32 %v1386, %v1387
    %v1389 = vand.u32 %v1388, 4294901760
    %1390 = vmatpush2.msra.mxu0 %v1389
    %1391 = vmatprep.subr.mxu0 0.0
    %v1392 = vand.u32 %v248, 4294901760
    %v1393 = vsub.f32 %v248, %v1392
    %v1394 = vand.u32 %v1393, 4294901760
    %v1395 = vsub.f32 %v1393, %v1394
    %v1396 = vand.u32 %v1395, 4294901760
    %1397 = vmatpush2.msra.mxu0 %v1396
    %1398 = vmatprep.subr.mxu0 0.0
    %v1399 = vand.u32 %v247, 4294901760
    %v1400 = vsub.f32 %v247, %v1399
    %v1401 = vand.u32 %v1400, 4294901760
    %v1402 = vsub.f32 %v1400, %v1401
    %v1403 = vand.u32 %v1402, 4294901760
    %1404 = vmatpush2.msra.mxu0 %v1403
    %1405 = vmatprep.subr.mxu0 0.0
    %v1406 = vand.u32 %v246, 4294901760
    %v1407 = vsub.f32 %v246, %v1406
    %v1408 = vand.u32 %v1407, 4294901760
    %v1409 = vsub.f32 %v1407, %v1408
    %v1410 = vand.u32 %v1409, 4294901760
    %1411 = vmatpush2.msra.mxu0 %v1410
    %1412 = vmatprep.subr.mxu0 0.0
    %v1413 = vand.u32 %v245, 4294901760
    %v1414 = vsub.f32 %v245, %v1413
    %v1415 = vand.u32 %v1414, 4294901760
    %v1416 = vsub.f32 %v1414, %v1415
    %v1417 = vand.u32 %v1416, 4294901760
    %1418 = vmatpush2.msra.mxu0 %v1417
    %1419 = vmatprep.subr.mxu0 0.0
    %v1420 = vand.u32 %v244, 4294901760
    %v1421 = vsub.f32 %v244, %v1420
    %v1422 = vand.u32 %v1421, 4294901760
    %v1423 = vsub.f32 %v1421, %v1422
    %v1424 = vand.u32 %v1423, 4294901760
    %1425 = vmatpush2.msra.mxu0 %v1424
    %1426 = vmatprep.subr.mxu0 0.0
    %v1427 = vand.u32 %v243, 4294901760
    %v1428 = vsub.f32 %v243, %v1427
    %v1429 = vand.u32 %v1428, 4294901760
    %v1430 = vsub.f32 %v1428, %v1429
    %v1431 = vand.u32 %v1430, 4294901760
    %1432 = vmatpush2.msra.mxu0 %v1431
    %1433 = vmatprep.subr.mxu0 0.0
    %v1434 = vand.u32 %v242, 4294901760
    %v1435 = vsub.f32 %v242, %v1434
    %v1436 = vand.u32 %v1435, 4294901760
    %v1437 = vsub.f32 %v1435, %v1436
    %v1438 = vand.u32 %v1437, 4294901760
    %1439 = vmatpush2.msra.mxu0 %v1438
    %1440 = vmatprep.subr.mxu0 0.0
    %v1441 = vand.u32 %v241, 4294901760
    %v1442 = vsub.f32 %v241, %v1441
    %v1443 = vand.u32 %v1442, 4294901760
    %v1444 = vsub.f32 %v1442, %v1443
    %v1445 = vand.u32 %v1444, 4294901760
    %1446 = vmatpush2.msra.mxu0 %v1445
    %1447 = vmatprep.subr.mxu0 0.0
    %v1448 = vand.u32 %v240, 4294901760
    %v1449 = vsub.f32 %v240, %v1448
    %v1450 = vand.u32 %v1449, 4294901760
    %v1451 = vsub.f32 %v1449, %v1450
    %v1452 = vand.u32 %v1451, 4294901760
    %1453 = vmatpush2.msra.mxu0 %v1452
    %v1454 = vand.u32 %v26, 4294901760
    %1455 = vmatprep.mubr.f32.mxu0 %v1454
    %v1456 = vand.u32 %v25, 4294901760
    %1457 = vmatmul.mubr.f32.gmra.mxu0 %v1456
    %v1458 = vpop.f32.mrf.mxu0
    %v1459 = vadd.f32 %v1227, %v1458
    %v1460 = vpop.f32.mrf.mxu0
    %1461 = vdwg.mxu0
    %1462 = vmatprep.subr.mxu0 0.0
    %v1463 = vand.u32 %v239, 4294901760
    %v1464 = vsub.f32 %v239, %v1463
    %1465 = vmatpush1.msra.mxu0 %v1464
    %1466 = vmatprep.subr.mxu0 0.0
    %v1467 = vand.u32 %v238, 4294901760
    %v1468 = vsub.f32 %v238, %v1467
    %1469 = vmatpush1.msra.mxu0 %v1468
    %1470 = vmatprep.subr.mxu0 0.0
    %v1471 = vand.u32 %v237, 4294901760
    %v1472 = vsub.f32 %v237, %v1471
    %1473 = vmatpush1.msra.mxu0 %v1472
    %1474 = vmatprep.subr.mxu0 0.0
    %v1475 = vand.u32 %v236, 4294901760
    %v1476 = vsub.f32 %v236, %v1475
    %1477 = vmatpush1.msra.mxu0 %v1476
    %1478 = vmatprep.subr.mxu0 0.0
    %v1479 = vand.u32 %v235, 4294901760
    %v1480 = vsub.f32 %v235, %v1479
    %1481 = vmatpush1.msra.mxu0 %v1480
    %1482 = vmatprep.subr.mxu0 0.0
    %v1483 = vand.u32 %v234, 4294901760
    %v1484 = vsub.f32 %v234, %v1483
    %1485 = vmatpush1.msra.mxu0 %v1484
    %1486 = vmatprep.subr.mxu0 0.0
    %v1487 = vand.u32 %v233, 4294901760
    %v1488 = vsub.f32 %v233, %v1487
    %1489 = vmatpush1.msra.mxu0 %v1488
    %1490 = vmatprep.subr.mxu0 0.0
    %v1491 = vand.u32 %v232, 4294901760
    %v1492 = vsub.f32 %v232, %v1491
    %1493 = vmatpush1.msra.mxu0 %v1492
    %1494 = vmatprep.subr.mxu0 0.0
    %v1495 = vand.u32 %v231, 4294901760
    %v1496 = vsub.f32 %v231, %v1495
    %1497 = vmatpush1.msra.mxu0 %v1496
    %1498 = vmatprep.subr.mxu0 0.0
    %v1499 = vand.u32 %v230, 4294901760
    %v1500 = vsub.f32 %v230, %v1499
    %1501 = vmatpush1.msra.mxu0 %v1500
    %1502 = vmatprep.subr.mxu0 0.0
    %v1503 = vand.u32 %v229, 4294901760
    %v1504 = vsub.f32 %v229, %v1503
    %1505 = vmatpush1.msra.mxu0 %v1504
    %1506 = vmatprep.subr.mxu0 0.0
    %v1507 = vand.u32 %v228, 4294901760
    %v1508 = vsub.f32 %v228, %v1507
    %1509 = vmatpush1.msra.mxu0 %v1508
    %1510 = vmatprep.subr.mxu0 0.0
    %v1511 = vand.u32 %v227, 4294901760
    %v1512 = vsub.f32 %v227, %v1511
    %1513 = vmatpush1.msra.mxu0 %v1512
    %1514 = vmatprep.subr.mxu0 0.0
    %v1515 = vand.u32 %v226, 4294901760
    %v1516 = vsub.f32 %v226, %v1515
    %1517 = vmatpush1.msra.mxu0 %v1516
    %1518 = vmatprep.subr.mxu0 0.0
    %v1519 = vand.u32 %v225, 4294901760
    %v1520 = vsub.f32 %v225, %v1519
    %1521 = vmatpush1.msra.mxu0 %v1520
    %1522 = vmatprep.subr.mxu0 0.0
    %v1523 = vand.u32 %v224, 4294901760
    %v1524 = vsub.f32 %v224, %v1523
    %1525 = vmatpush1.msra.mxu0 %v1524
    %1526 = vmatprep.subr.mxu0 0.0
    %v1527 = vand.u32 %v255, 4294901760
    %v1528 = vsub.f32 %v255, %v1527
    %1529 = vmatpush2.msra.mxu0 %v1528
    %1530 = vmatprep.subr.mxu0 0.0
    %v1531 = vand.u32 %v254, 4294901760
    %v1532 = vsub.f32 %v254, %v1531
    %1533 = vmatpush2.msra.mxu0 %v1532
    %1534 = vmatprep.subr.mxu0 0.0
    %v1535 = vand.u32 %v253, 4294901760
    %v1536 = vsub.f32 %v253, %v1535
    %1537 = vmatpush2.msra.mxu0 %v1536
    %1538 = vmatprep.subr.mxu0 0.0
    %v1539 = vand.u32 %v252, 4294901760
    %v1540 = vsub.f32 %v252, %v1539
    %1541 = vmatpush2.msra.mxu0 %v1540
    %1542 = vmatprep.subr.mxu0 0.0
    %v1543 = vand.u32 %v251, 4294901760
    %v1544 = vsub.f32 %v251, %v1543
    %1545 = vmatpush2.msra.mxu0 %v1544
    %1546 = vmatprep.subr.mxu0 0.0
    %v1547 = vand.u32 %v250, 4294901760
    %v1548 = vsub.f32 %v250, %v1547
    %1549 = vmatpush2.msra.mxu0 %v1548
    %1550 = vmatprep.subr.mxu0 0.0
    %v1551 = vand.u32 %v249, 4294901760
    %v1552 = vsub.f32 %v249, %v1551
    %1553 = vmatpush2.msra.mxu0 %v1552
    %1554 = vmatprep.subr.mxu0 0.0
    %v1555 = vand.u32 %v248, 4294901760
    %v1556 = vsub.f32 %v248, %v1555
    %1557 = vmatpush2.msra.mxu0 %v1556
    %1558 = vmatprep.subr.mxu0 0.0
    %v1559 = vand.u32 %v247, 4294901760
    %v1560 = vsub.f32 %v247, %v1559
    %1561 = vmatpush2.msra.mxu0 %v1560
    %1562 = vmatprep.subr.mxu0 0.0
    %v1563 = vand.u32 %v246, 4294901760
    %v1564 = vsub.f32 %v246, %v1563
    %1565 = vmatpush2.msra.mxu0 %v1564
    %1566 = vmatprep.subr.mxu0 0.0
    %v1567 = vand.u32 %v245, 4294901760
    %v1568 = vsub.f32 %v245, %v1567
    %1569 = vmatpush2.msra.mxu0 %v1568
    %1570 = vmatprep.subr.mxu0 0.0
    %v1571 = vand.u32 %v244, 4294901760
    %v1572 = vsub.f32 %v244, %v1571
    %1573 = vmatpush2.msra.mxu0 %v1572
    %1574 = vmatprep.subr.mxu0 0.0
    %v1575 = vand.u32 %v243, 4294901760
    %v1576 = vsub.f32 %v243, %v1575
    %1577 = vmatpush2.msra.mxu0 %v1576
    %1578 = vmatprep.subr.mxu0 0.0
    %v1579 = vand.u32 %v242, 4294901760
    %v1580 = vsub.f32 %v242, %v1579
    %1581 = vmatpush2.msra.mxu0 %v1580
    %1582 = vmatprep.subr.mxu0 0.0
    %v1583 = vand.u32 %v241, 4294901760
    %v1584 = vsub.f32 %v241, %v1583
    %1585 = vmatpush2.msra.mxu0 %v1584
    %1586 = vmatprep.subr.mxu0 0.0
    %v1587 = vand.u32 %v240, 4294901760
    %v1588 = vsub.f32 %v240, %v1587
    %1589 = vmatpush2.msra.mxu0 %v1588
    %v1590 = vand.u32 %v26, 4294901760
    %v1591 = vsub.f32 %v26, %v1590
    %1592 = vmatprep.mubr.f32.mxu0 %v1591
    %v1593 = vand.u32 %v25, 4294901760
    %v1594 = vsub.f32 %v25, %v1593
    %1595 = vmatmul.mubr.f32.gmra.mxu0 %v1594
    %v1596 = vpop.f32.mrf.mxu0
    %v1597 = vadd.f32 %v1459, %v1596
    %v1598 = vpop.f32.mrf.mxu0
    %1599 = vdwg.mxu0
    %1600 = vmatprep.subr.mxu0 0.0
    %v1601 = vand.u32 %v239, 4294901760
    %1602 = vmatpush1.msra.mxu0 %v1601
    %1603 = vmatprep.subr.mxu0 0.0
    %v1604 = vand.u32 %v238, 4294901760
    %1605 = vmatpush1.msra.mxu0 %v1604
    %1606 = vmatprep.subr.mxu0 0.0
    %v1607 = vand.u32 %v237, 4294901760
    %1608 = vmatpush1.msra.mxu0 %v1607
    %1609 = vmatprep.subr.mxu0 0.0
    %v1610 = vand.u32 %v236, 4294901760
    %1611 = vmatpush1.msra.mxu0 %v1610
    %1612 = vmatprep.subr.mxu0 0.0
    %v1613 = vand.u32 %v235, 4294901760
    %1614 = vmatpush1.msra.mxu0 %v1613
    %1615 = vmatprep.subr.mxu0 0.0
    %v1616 = vand.u32 %v234, 4294901760
    %1617 = vmatpush1.msra.mxu0 %v1616
    %1618 = vmatprep.subr.mxu0 0.0
    %v1619 = vand.u32 %v233, 4294901760
    %1620 = vmatpush1.msra.mxu0 %v1619
    %1621 = vmatprep.subr.mxu0 0.0
    %v1622 = vand.u32 %v232, 4294901760
    %1623 = vmatpush1.msra.mxu0 %v1622
    %1624 = vmatprep.subr.mxu0 0.0
    %v1625 = vand.u32 %v231, 4294901760
    %1626 = vmatpush1.msra.mxu0 %v1625
    %1627 = vmatprep.subr.mxu0 0.0
    %v1628 = vand.u32 %v230, 4294901760
    %1629 = vmatpush1.msra.mxu0 %v1628
    %1630 = vmatprep.subr.mxu0 0.0
    %v1631 = vand.u32 %v229, 4294901760
    %1632 = vmatpush1.msra.mxu0 %v1631
    %1633 = vmatprep.subr.mxu0 0.0
    %v1634 = vand.u32 %v228, 4294901760
    %1635 = vmatpush1.msra.mxu0 %v1634
    %1636 = vmatprep.subr.mxu0 0.0
    %v1637 = vand.u32 %v227, 4294901760
    %1638 = vmatpush1.msra.mxu0 %v1637
    %1639 = vmatprep.subr.mxu0 0.0
    %v1640 = vand.u32 %v226, 4294901760
    %1641 = vmatpush1.msra.mxu0 %v1640
    %1642 = vmatprep.subr.mxu0 0.0
    %v1643 = vand.u32 %v225, 4294901760
    %1644 = vmatpush1.msra.mxu0 %v1643
    %1645 = vmatprep.subr.mxu0 0.0
    %v1646 = vand.u32 %v224, 4294901760
    %1647 = vmatpush1.msra.mxu0 %v1646
    %1648 = vmatprep.subr.mxu0 0.0
    %v1649 = vand.u32 %v255, 4294901760
    %1650 = vmatpush2.msra.mxu0 %v1649
    %1651 = vmatprep.subr.mxu0 0.0
    %v1652 = vand.u32 %v254, 4294901760
    %1653 = vmatpush2.msra.mxu0 %v1652
    %1654 = vmatprep.subr.mxu0 0.0
    %v1655 = vand.u32 %v253, 4294901760
    %1656 = vmatpush2.msra.mxu0 %v1655
    %1657 = vmatprep.subr.mxu0 0.0
    %v1658 = vand.u32 %v252, 4294901760
    %1659 = vmatpush2.msra.mxu0 %v1658
    %1660 = vmatprep.subr.mxu0 0.0
    %v1661 = vand.u32 %v251, 4294901760
    %1662 = vmatpush2.msra.mxu0 %v1661
    %1663 = vmatprep.subr.mxu0 0.0
    %v1664 = vand.u32 %v250, 4294901760
    %1665 = vmatpush2.msra.mxu0 %v1664
    %1666 = vmatprep.subr.mxu0 0.0
    %v1667 = vand.u32 %v249, 4294901760
    %1668 = vmatpush2.msra.mxu0 %v1667
    %1669 = vmatprep.subr.mxu0 0.0
    %v1670 = vand.u32 %v248, 4294901760
    %1671 = vmatpush2.msra.mxu0 %v1670
    %1672 = vmatprep.subr.mxu0 0.0
    %v1673 = vand.u32 %v247, 4294901760
    %1674 = vmatpush2.msra.mxu0 %v1673
    %1675 = vmatprep.subr.mxu0 0.0
    %v1676 = vand.u32 %v246, 4294901760
    %1677 = vmatpush2.msra.mxu0 %v1676
    %1678 = vmatprep.subr.mxu0 0.0
    %v1679 = vand.u32 %v245, 4294901760
    %1680 = vmatpush2.msra.mxu0 %v1679
    %1681 = vmatprep.subr.mxu0 0.0
    %v1682 = vand.u32 %v244, 4294901760
    %1683 = vmatpush2.msra.mxu0 %v1682
    %1684 = vmatprep.subr.mxu0 0.0
    %v1685 = vand.u32 %v243, 4294901760
    %1686 = vmatpush2.msra.mxu0 %v1685
    %1687 = vmatprep.subr.mxu0 0.0
    %v1688 = vand.u32 %v242, 4294901760
    %1689 = vmatpush2.msra.mxu0 %v1688
    %1690 = vmatprep.subr.mxu0 0.0
    %v1691 = vand.u32 %v241, 4294901760
    %1692 = vmatpush2.msra.mxu0 %v1691
    %1693 = vmatprep.subr.mxu0 0.0
    %v1694 = vand.u32 %v240, 4294901760
    %1695 = vmatpush2.msra.mxu0 %v1694
    %v1696 = vand.u32 %v26, 4294901760
    %v1697 = vsub.f32 %v26, %v1696
    %v1698 = vand.u32 %v1697, 4294901760
    %1699 = vmatprep.mubr.f32.mxu0 %v1698
    %v1700 = vand.u32 %v25, 4294901760
    %v1701 = vsub.f32 %v25, %v1700
    %v1702 = vand.u32 %v1701, 4294901760
    %1703 = vmatmul.mubr.f32.gmra.mxu0 %v1702
    %v1704 = vpop.f32.mrf.mxu0
    %v1705 = vadd.f32 %v1597, %v1704
    %v1706 = vpop.f32.mrf.mxu0
    %1707 = vdwg.mxu0
    %1708 = vmatprep.subr.mxu0 0.0
    %v1709 = vand.u32 %v239, 4294901760
    %v1710 = vsub.f32 %v239, %v1709
    %v1711 = vand.u32 %v1710, 4294901760
    %1712 = vmatpush1.msra.mxu0 %v1711
    %1713 = vmatprep.subr.mxu0 0.0
    %v1714 = vand.u32 %v238, 4294901760
    %v1715 = vsub.f32 %v238, %v1714
    %v1716 = vand.u32 %v1715, 4294901760
    %1717 = vmatpush1.msra.mxu0 %v1716
    %1718 = vmatprep.subr.mxu0 0.0
    %v1719 = vand.u32 %v237, 4294901760
    %v1720 = vsub.f32 %v237, %v1719
    %v1721 = vand.u32 %v1720, 4294901760
    %1722 = vmatpush1.msra.mxu0 %v1721
    %1723 = vmatprep.subr.mxu0 0.0
    %v1724 = vand.u32 %v236, 4294901760
    %v1725 = vsub.f32 %v236, %v1724
    %v1726 = vand.u32 %v1725, 4294901760
    %1727 = vmatpush1.msra.mxu0 %v1726
    %1728 = vmatprep.subr.mxu0 0.0
    %v1729 = vand.u32 %v235, 4294901760
    %v1730 = vsub.f32 %v235, %v1729
    %v1731 = vand.u32 %v1730, 4294901760
    %1732 = vmatpush1.msra.mxu0 %v1731
    %1733 = vmatprep.subr.mxu0 0.0
    %v1734 = vand.u32 %v234, 4294901760
    %v1735 = vsub.f32 %v234, %v1734
    %v1736 = vand.u32 %v1735, 4294901760
    %1737 = vmatpush1.msra.mxu0 %v1736
    %1738 = vmatprep.subr.mxu0 0.0
    %v1739 = vand.u32 %v233, 4294901760
    %v1740 = vsub.f32 %v233, %v1739
    %v1741 = vand.u32 %v1740, 4294901760
    %1742 = vmatpush1.msra.mxu0 %v1741
    %1743 = vmatprep.subr.mxu0 0.0
    %v1744 = vand.u32 %v232, 4294901760
    %v1745 = vsub.f32 %v232, %v1744
    %v1746 = vand.u32 %v1745, 4294901760
    %1747 = vmatpush1.msra.mxu0 %v1746
    %1748 = vmatprep.subr.mxu0 0.0
    %v1749 = vand.u32 %v231, 4294901760
    %v1750 = vsub.f32 %v231, %v1749
    %v1751 = vand.u32 %v1750, 4294901760
    %1752 = vmatpush1.msra.mxu0 %v1751
    %1753 = vmatprep.subr.mxu0 0.0
    %v1754 = vand.u32 %v230, 4294901760
    %v1755 = vsub.f32 %v230, %v1754
    %v1756 = vand.u32 %v1755, 4294901760
    %1757 = vmatpush1.msra.mxu0 %v1756
    %1758 = vmatprep.subr.mxu0 0.0
    %v1759 = vand.u32 %v229, 4294901760
    %v1760 = vsub.f32 %v229, %v1759
    %v1761 = vand.u32 %v1760, 4294901760
    %1762 = vmatpush1.msra.mxu0 %v1761
    %1763 = vmatprep.subr.mxu0 0.0
    %v1764 = vand.u32 %v228, 4294901760
    %v1765 = vsub.f32 %v228, %v1764
    %v1766 = vand.u32 %v1765, 4294901760
    %1767 = vmatpush1.msra.mxu0 %v1766
    %1768 = vmatprep.subr.mxu0 0.0
    %v1769 = vand.u32 %v227, 4294901760
    %v1770 = vsub.f32 %v227, %v1769
    %v1771 = vand.u32 %v1770, 4294901760
    %1772 = vmatpush1.msra.mxu0 %v1771
    %1773 = vmatprep.subr.mxu0 0.0
    %v1774 = vand.u32 %v226, 4294901760
    %v1775 = vsub.f32 %v226, %v1774
    %v1776 = vand.u32 %v1775, 4294901760
    %1777 = vmatpush1.msra.mxu0 %v1776
    %1778 = vmatprep.subr.mxu0 0.0
    %v1779 = vand.u32 %v225, 4294901760
    %v1780 = vsub.f32 %v225, %v1779
    %v1781 = vand.u32 %v1780, 4294901760
    %1782 = vmatpush1.msra.mxu0 %v1781
    %1783 = vmatprep.subr.mxu0 0.0
    %v1784 = vand.u32 %v224, 4294901760
    %v1785 = vsub.f32 %v224, %v1784
    %v1786 = vand.u32 %v1785, 4294901760
    %1787 = vmatpush1.msra.mxu0 %v1786
    %1788 = vmatprep.subr.mxu0 0.0
    %v1789 = vand.u32 %v255, 4294901760
    %v1790 = vsub.f32 %v255, %v1789
    %v1791 = vand.u32 %v1790, 4294901760
    %1792 = vmatpush2.msra.mxu0 %v1791
    %1793 = vmatprep.subr.mxu0 0.0
    %v1794 = vand.u32 %v254, 4294901760
    %v1795 = vsub.f32 %v254, %v1794
    %v1796 = vand.u32 %v1795, 4294901760
    %1797 = vmatpush2.msra.mxu0 %v1796
    %1798 = vmatprep.subr.mxu0 0.0
    %v1799 = vand.u32 %v253, 4294901760
    %v1800 = vsub.f32 %v253, %v1799
    %v1801 = vand.u32 %v1800, 4294901760
    %1802 = vmatpush2.msra.mxu0 %v1801
    %1803 = vmatprep.subr.mxu0 0.0
    %v1804 = vand.u32 %v252, 4294901760
    %v1805 = vsub.f32 %v252, %v1804
    %v1806 = vand.u32 %v1805, 4294901760
    %1807 = vmatpush2.msra.mxu0 %v1806
    %1808 = vmatprep.subr.mxu0 0.0
    %v1809 = vand.u32 %v251, 4294901760
    %v1810 = vsub.f32 %v251, %v1809
    %v1811 = vand.u32 %v1810, 4294901760
    %1812 = vmatpush2.msra.mxu0 %v1811
    %1813 = vmatprep.subr.mxu0 0.0
    %v1814 = vand.u32 %v250, 4294901760
    %v1815 = vsub.f32 %v250, %v1814
    %v1816 = vand.u32 %v1815, 4294901760
    %1817 = vmatpush2.msra.mxu0 %v1816
    %1818 = vmatprep.subr.mxu0 0.0
    %v1819 = vand.u32 %v249, 4294901760
    %v1820 = vsub.f32 %v249, %v1819
    %v1821 = vand.u32 %v1820, 4294901760
    %1822 = vmatpush2.msra.mxu0 %v1821
    %1823 = vmatprep.subr.mxu0 0.0
    %v1824 = vand.u32 %v248, 4294901760
    %v1825 = vsub.f32 %v248, %v1824
    %v1826 = vand.u32 %v1825, 4294901760
    %1827 = vmatpush2.msra.mxu0 %v1826
    %1828 = vmatprep.subr.mxu0 0.0
    %v1829 = vand.u32 %v247, 4294901760
    %v1830 = vsub.f32 %v247, %v1829
    %v1831 = vand.u32 %v1830, 4294901760
    %1832 = vmatpush2.msra.mxu0 %v1831
    %1833 = vmatprep.subr.mxu0 0.0
    %v1834 = vand.u32 %v246, 4294901760
    %v1835 = vsub.f32 %v246, %v1834
    %v1836 = vand.u32 %v1835, 4294901760
    %1837 = vmatpush2.msra.mxu0 %v1836
    %1838 = vmatprep.subr.mxu0 0.0
    %v1839 = vand.u32 %v245, 4294901760
    %v1840 = vsub.f32 %v245, %v1839
    %v1841 = vand.u32 %v1840, 4294901760
    %1842 = vmatpush2.msra.mxu0 %v1841
    %1843 = vmatprep.subr.mxu0 0.0
    %v1844 = vand.u32 %v244, 4294901760
    %v1845 = vsub.f32 %v244, %v1844
    %v1846 = vand.u32 %v1845, 4294901760
    %1847 = vmatpush2.msra.mxu0 %v1846
    %1848 = vmatprep.subr.mxu0 0.0
    %v1849 = vand.u32 %v243, 4294901760
    %v1850 = vsub.f32 %v243, %v1849
    %v1851 = vand.u32 %v1850, 4294901760
    %1852 = vmatpush2.msra.mxu0 %v1851
    %1853 = vmatprep.subr.mxu0 0.0
    %v1854 = vand.u32 %v242, 4294901760
    %v1855 = vsub.f32 %v242, %v1854
    %v1856 = vand.u32 %v1855, 4294901760
    %1857 = vmatpush2.msra.mxu0 %v1856
    %1858 = vmatprep.subr.mxu0 0.0
    %v1859 = vand.u32 %v241, 4294901760
    %v1860 = vsub.f32 %v241, %v1859
    %v1861 = vand.u32 %v1860, 4294901760
    %1862 = vmatpush2.msra.mxu0 %v1861
    %1863 = vmatprep.subr.mxu0 0.0
    %v1864 = vand.u32 %v240, 4294901760
    %v1865 = vsub.f32 %v240, %v1864
    %v1866 = vand.u32 %v1865, 4294901760
    %1867 = vmatpush2.msra.mxu0 %v1866
    %v1868 = vand.u32 %v26, 4294901760
    %1869 = vmatprep.mubr.f32.mxu0 %v1868
    %v1870 = vand.u32 %v25, 4294901760
    %1871 = vmatmul.mubr.f32.gmra.mxu0 %v1870
    %v1872 = vpop.f32.mrf.mxu0
    %v1873 = vadd.f32 %v1705, %v1872
    %v1874 = vpop.f32.mrf.mxu0
    %1875 = vdwg.mxu0
    %1876 = vmatprep.subr.mxu0 0.0
    %v1877 = vand.u32 %v239, 4294901760
    %1878 = vmatpush1.msra.mxu0 %v1877
    %1879 = vmatprep.subr.mxu0 0.0
    %v1880 = vand.u32 %v238, 4294901760
    %1881 = vmatpush1.msra.mxu0 %v1880
    %1882 = vmatprep.subr.mxu0 0.0
    %v1883 = vand.u32 %v237, 4294901760
    %1884 = vmatpush1.msra.mxu0 %v1883
    %1885 = vmatprep.subr.mxu0 0.0
    %v1886 = vand.u32 %v236, 4294901760
    %1887 = vmatpush1.msra.mxu0 %v1886
    %1888 = vmatprep.subr.mxu0 0.0
    %v1889 = vand.u32 %v235, 4294901760
    %1890 = vmatpush1.msra.mxu0 %v1889
    %1891 = vmatprep.subr.mxu0 0.0
    %v1892 = vand.u32 %v234, 4294901760
    %1893 = vmatpush1.msra.mxu0 %v1892
    %1894 = vmatprep.subr.mxu0 0.0
    %v1895 = vand.u32 %v233, 4294901760
    %1896 = vmatpush1.msra.mxu0 %v1895
    %1897 = vmatprep.subr.mxu0 0.0
    %v1898 = vand.u32 %v232, 4294901760
    %1899 = vmatpush1.msra.mxu0 %v1898
    %1900 = vmatprep.subr.mxu0 0.0
    %v1901 = vand.u32 %v231, 4294901760
    %1902 = vmatpush1.msra.mxu0 %v1901
    %1903 = vmatprep.subr.mxu0 0.0
    %v1904 = vand.u32 %v230, 4294901760
    %1905 = vmatpush1.msra.mxu0 %v1904
    %1906 = vmatprep.subr.mxu0 0.0
    %v1907 = vand.u32 %v229, 4294901760
    %1908 = vmatpush1.msra.mxu0 %v1907
    %1909 = vmatprep.subr.mxu0 0.0
    %v1910 = vand.u32 %v228, 4294901760
    %1911 = vmatpush1.msra.mxu0 %v1910
    %1912 = vmatprep.subr.mxu0 0.0
    %v1913 = vand.u32 %v227, 4294901760
    %1914 = vmatpush1.msra.mxu0 %v1913
    %1915 = vmatprep.subr.mxu0 0.0
    %v1916 = vand.u32 %v226, 4294901760
    %1917 = vmatpush1.msra.mxu0 %v1916
    %1918 = vmatprep.subr.mxu0 0.0
    %v1919 = vand.u32 %v225, 4294901760
    %1920 = vmatpush1.msra.mxu0 %v1919
    %1921 = vmatprep.subr.mxu0 0.0
    %v1922 = vand.u32 %v224, 4294901760
    %1923 = vmatpush1.msra.mxu0 %v1922
    %1924 = vmatprep.subr.mxu0 0.0
    %v1925 = vand.u32 %v255, 4294901760
    %1926 = vmatpush2.msra.mxu0 %v1925
    %1927 = vmatprep.subr.mxu0 0.0
    %v1928 = vand.u32 %v254, 4294901760
    %1929 = vmatpush2.msra.mxu0 %v1928
    %1930 = vmatprep.subr.mxu0 0.0
    %v1931 = vand.u32 %v253, 4294901760
    %1932 = vmatpush2.msra.mxu0 %v1931
    %1933 = vmatprep.subr.mxu0 0.0
    %v1934 = vand.u32 %v252, 4294901760
    %1935 = vmatpush2.msra.mxu0 %v1934
    %1936 = vmatprep.subr.mxu0 0.0
    %v1937 = vand.u32 %v251, 4294901760
    %1938 = vmatpush2.msra.mxu0 %v1937
    %1939 = vmatprep.subr.mxu0 0.0
    %v1940 = vand.u32 %v250, 4294901760
    %1941 = vmatpush2.msra.mxu0 %v1940
    %1942 = vmatprep.subr.mxu0 0.0
    %v1943 = vand.u32 %v249, 4294901760
    %1944 = vmatpush2.msra.mxu0 %v1943
    %1945 = vmatprep.subr.mxu0 0.0
    %v1946 = vand.u32 %v248, 4294901760
    %1947 = vmatpush2.msra.mxu0 %v1946
    %1948 = vmatprep.subr.mxu0 0.0
    %v1949 = vand.u32 %v247, 4294901760
    %1950 = vmatpush2.msra.mxu0 %v1949
    %1951 = vmatprep.subr.mxu0 0.0
    %v1952 = vand.u32 %v246, 4294901760
    %1953 = vmatpush2.msra.mxu0 %v1952
    %1954 = vmatprep.subr.mxu0 0.0
    %v1955 = vand.u32 %v245, 4294901760
    %1956 = vmatpush2.msra.mxu0 %v1955
    %1957 = vmatprep.subr.mxu0 0.0
    %v1958 = vand.u32 %v244, 4294901760
    %1959 = vmatpush2.msra.mxu0 %v1958
    %1960 = vmatprep.subr.mxu0 0.0
    %v1961 = vand.u32 %v243, 4294901760
    %1962 = vmatpush2.msra.mxu0 %v1961
    %1963 = vmatprep.subr.mxu0 0.0
    %v1964 = vand.u32 %v242, 4294901760
    %1965 = vmatpush2.msra.mxu0 %v1964
    %1966 = vmatprep.subr.mxu0 0.0
    %v1967 = vand.u32 %v241, 4294901760
    %1968 = vmatpush2.msra.mxu0 %v1967
    %1969 = vmatprep.subr.mxu0 0.0
    %v1970 = vand.u32 %v240, 4294901760
    %1971 = vmatpush2.msra.mxu0 %v1970
    %v1972 = vand.u32 %v26, 4294901760
    %1973 = vmatprep.mubr.f32.mxu0 %v1972
    %v1974 = vand.u32 %v25, 4294901760
    %1975 = vmatmul.mubr.f32.gmra.mxu0 %v1974
    %v1976 = vpop.f32.mrf.mxu0
    %v1977 = vadd.f32 %v1873, %v1976
    %v1978 = vpop.f32.mrf.mxu0
    %1979 = vdwg.mxu0
    %v1980 = vmul.f32 %v1115, %v1977
    %1981 = vst [vmem:[#allocation5] sm:$0xff] %v1980
    // Predicated region
    $region10: #{tpu_custom_call.1} parent=1 // pred_check
      _
    $region11: #{tpu_custom_call.1} parent=1 // pred_check_branch
      %1983 = sbr.rel (0) target = $region13
    $region12: #{tpu_custom_call.1} parent=1 // pred_region
      %s1985 = ssub.s32 128, 128
      %1986 = vsyncadd [#allocation4], %s1985
      %s1988 = sshll.u32 [#allocation5], 4
      %s1989 = int_to_ptr.vmem [resolvable:$true] %s1988
      %1991 = dma.vmem_to_hbm [thread:$0]  %s1989, 128, %s1, [#allocation4]
    $region13: #{tpu_custom_call.1} parent=1 // pred_fallthru
      _
    // Predicated region
    $region14: #{tpu_custom_call.1} parent=1 // pred_check
      _
    $region15: #{tpu_custom_call.1} parent=1 // pred_check_branch
      %1993 = sbr.rel (0) target = $region17
    $region16: #{tpu_custom_call.1} parent=1 // pred_region
      %1994 = dma.done [#allocation4], 128
    $region17: #{tpu_custom_call.1} parent=1 // pred_fallthru
      _
    %1995 = vsyncpa [#allocation3], 1
    %1996 = vsyncpa [#allocation4], 1

</llo_original>
